<compile_context>
chip_gen: v7x
topology: tpu7x:2x2x1
jax: 0.10.0
libtpu: 0.0.40
codegen_flags: <defaults>
</compile_context>

<pallas_src>
import math

import jax
import jax.numpy as jnp
from jax.experimental import pallas as pl
from jax.experimental.pallas import tpu as pltpu


# ----------------------------------------------------------------------------
# Fused Pallas kernel: all LSTM layers + last-timestep gather + Linear head
# ----------------------------------------------------------------------------
def _fused_lstm_kernel(x_ref, len_ref, *refs):
    """Fused multi-layer LSTM forward for one batch tile.

    x_ref   : (L*NB, D)   bf16, time-major within the tile
    len_ref : (NB, 1)     int32 valid lengths
    refs    : [w_ih_t, w_hh_t, b] * num_layers            (bf16, bf16, f32)
              + [w_lin_t (bf16), b_lin (f32), out_ref (NB, OUT) f32]
              + scratch: pre_s (L*NB, 4H) f32, hseq_s (L*NB, H) f32
    """
    pre_s, hseq_s = refs[-2], refs[-1]
    out_ref = refs[-3]
    wlin_ref, blin_ref = refs[-5], refs[-4]
    layer_refs = refs[:-5]
    num_layers = len(layer_refs) // 3

    NB = len_ref.shape[0]
    LN = x_ref.shape[0]
    L = LN // NB
    H = layer_refs[1].shape[0]

    lengths = len_ref[...]  # (NB, 1) int32

    # Hoisted per-lane gate constants (PyTorch gate order along 4H: i, f, g, o).
    # sigmoid(x) = 0.5*tanh(0.5*x) + 0.5  -> one tanh pass covers all 4 gates:
    #   g lanes:      scale=1.0, offset=0.0  ->  tanh(x)
    #   i/f/o lanes:  scale=0.5, offset=0.5  ->  sigmoid(x)
    lane = jax.lax.broadcasted_iota(jnp.int32, (NB, 4 * H), 1)
    g_mask = (lane >= 2 * H) & (lane < 3 * H)
    gate_scale = jnp.where(g_mask, 1.0, 0.5).astype(jnp.float32)
    gate_off = jnp.where(g_mask, 0.0, 0.5).astype(jnp.float32)

    # Layer-0 input projection, batched over all timesteps (off the serial
    # path), bias folded in: (L*NB, D)bf16 @ (D, 4H)bf16 -> f32 VMEM scratch.
    pre_s[...] = (
        jnp.dot(x_ref[...], layer_refs[0][...], preferred_element_type=jnp.float32)
        + layer_refs[2][...]
    )

    for layer in range(num_layers):
        whh = layer_refs[3 * layer + 1][...]  # (H, 4H) bf16, read once per layer
        is_top = layer + 1 == num_layers

        h = jnp.zeros((NB, H), jnp.float32)
        c = jnp.zeros((NB, H), jnp.float32)
        h_bf = h.astype(jnp.bfloat16)

        # Static, fully-unrolled time loop: only the bf16 h @ W_hh matmul plus
        # one tanh pass and VPU gate math sit on the serial critical path.
        for t in range(L):
            pre = pre_s[t * NB:(t + 1) * NB, :]  # static, tile-aligned slice
            if t == 0:
                gates = pre  # h0 == 0 -> skip the recurrent matmul
            else:
                gates = pre + jnp.dot(h_bf, whh,
                                      preferred_element_type=jnp.float32)
            th = jnp.tanh(gates * gate_scale)      # single EUP pass (N,4H)
            act = th * gate_scale + gate_off       # VPU only
            i_g = act[:, 0 * H:1 * H]
            f_g = act[:, 1 * H:2 * H]
            g_g = act[:, 2 * H:3 * H]
            o_g = act[:, 3 * H:4 * H]
            c = f_g * c + i_g * g_g
            h = o_g * jnp.tanh(c)
            h_bf = h.astype(jnp.bfloat16)
            # Hidden sequence kept in VMEM scratch (bounds vreg pressure; feeds
            # the next layer's batched projection / the last-step capture).
            hseq_s[t * NB:(t + 1) * NB, :] = h

        if not is_top:
            # Next layer's input projection: one batched matmul off the serial
            # path, reading the VMEM-resident hidden sequence.
            # (nn.LSTM dropout=0.1 between layers is a no-op in eval mode.)
            w_next = layer_refs[3 * (layer + 1)][...]
            b_next = layer_refs[3 * (layer + 1) + 2][...]
            pre_s[...] = (
                jnp.dot(hseq_s[...].astype(jnp.bfloat16), w_next,
                        preferred_element_type=jnp.float32)
                + b_next
            )

    # Last-timestep capture (last_by_index), done AFTER the recurrence from the
    # top layer's hidden sequence: h at t == length-1 for each batch row.
    last = jnp.zeros((NB, H), jnp.float32)
    for t in range(L):
        last = jnp.where(lengths == (t + 1),
                         hseq_s[t * NB:(t + 1) * NB, :],
                         last)

    # Fused Linear head: (NB, H)bf16 @ (H, OUT)bf16 + (1, OUT). Single store.
    out_ref[...] = (
        jnp.dot(last.astype(jnp.bfloat16), wlin_ref[...],
                preferred_element_type=jnp.float32)
        + blin_ref[...]
    ).astype(out_ref.dtype)


# ----------------------------------------------------------------------------
# Wrapper
# ----------------------------------------------------------------------------
@jax.jit
def basic_lstm_forward(x, lengths, params):
    """Forward pass of BasicLSTM (bidirectional=False, eval mode).

    x:       (N, L, D)  batch-first, like the PyTorch module
    lengths: (N,)       int32 valid lengths (descending, as required by
                        pack_padded_sequence with enforce_sorted=True)
    """
    N, L, D = x.shape
    lstm_layers = params["lstm"]
    H = lstm_layers[0]["w_hh_t"].shape[0]
    OUT = params["linear"]["w_t"].shape[1]

    NB = 8                      # batch rows per tile (f32 sublane height)
    assert N % NB == 0, "batch must be a multiple of 8 for this example"
    NBT = N // NB

    # batch-first -> (NBT, L*NB, D): time-major *within* each batch tile so the
    # layer-0 projection is one (L*NB, D) @ (D, 4H) matmul per tile and each
    # timestep slice is a contiguous, tile-aligned (NB, ·) window.
    x_tm = jnp.transpose(x, (1, 0, 2)).astype(jnp.bfloat16)          # (L, N, D)
    x_tiles = (x_tm.reshape(L, NBT, NB, D)
                   .transpose(1, 0, 2, 3)
                   .reshape(NBT, L * NB, D))
    len_tiles = lengths.astype(jnp.int32).reshape(NBT, NB, 1)

    inputs = [x_tiles, len_tiles]
    in_specs = [
        pl.BlockSpec((pl.Squeezed(), L * NB, D), lambda b: (b, 0, 0)),
        pl.BlockSpec((pl.Squeezed(), NB, 1), lambda b: (b, 0, 0)),
    ]
    for layer in lstm_layers:
        in_dim = layer["w_ih_t"].shape[0]
        # Weights shipped as bf16 for the MXU; biases stay f32 (accumulated in
        # f32).  In production these would be stored bf16 instead of cast here.
        inputs += [layer["w_ih_t"].astype(jnp.bfloat16),
                   layer["w_hh_t"].astype(jnp.bfloat16),
                   layer["b"].astype(jnp.float32)]
        in_specs += [
            pl.BlockSpec((in_dim, 4 * H), lambda b: (0, 0)),
            pl.BlockSpec((H, 4 * H), lambda b: (0, 0)),
            pl.BlockSpec((1, 4 * H), lambda b: (0, 0)),
        ]
    inputs += [params["linear"]["w_t"].astype(jnp.bfloat16),
               params["linear"]["b"].astype(jnp.float32)]
    in_specs += [
        pl.BlockSpec((H, OUT), lambda b: (0, 0)),
        pl.BlockSpec((1, OUT), lambda b: (0, 0)),
    ]

    return pl.pallas_call(
        _fused_lstm_kernel,
        out_shape=jax.ShapeDtypeStruct((N, OUT), jnp.float32),
        grid=(NBT,),
        in_specs=in_specs,
        out_specs=pl.BlockSpec((NB, OUT), lambda b: (b, 0)),
        scratch_shapes=[
            pltpu.VMEM((L * NB, 4 * H), jnp.float32),   # pre-activations
            pltpu.VMEM((L * NB, H), jnp.float32),       # per-layer hidden seq
        ],
        compiler_params=pltpu.CompilerParams(
            # Independent batch tiles: runs on both TensorCores on v7x,
            # no-op on single-core v5e/v6e.
            dimension_semantics=("parallel",),
        ),
    )(*inputs)


# ----------------------------------------------------------------------------
# Pure-JAX references (numerical sanity checks)
# ----------------------------------------------------------------------------
def _lstm_layer_ref(x_tm, w_ih_t, w_hh_t, b, matmul_dtype):
    H = w_hh_t.shape[0]
    N = x_tm.shape[1]
    w_ih = w_ih_t.astype(matmul_dtype)
    w_hh = w_hh_t.astype(matmul_dtype)

    def step(carry, x_t):
        h, c = carry
        gates = (jnp.dot(x_t.astype(matmul_dtype), w_ih,
                         preferred_element_type=jnp.float32)
                 + jnp.dot(h.astype(matmul_dtype), w_hh,
                           preferred_element_type=jnp.float32)
                 + b)
        i = jax.nn.sigmoid(gates[:, 0 * H:1 * H])
        f = jax.nn.sigmoid(gates[:, 1 * H:2 * H])
        g = jnp.tanh(gates[:, 2 * H:3 * H])
        o = jax.nn.sigmoid(gates[:, 3 * H:4 * H])
        c = f * c + i * g
        h = o * jnp.tanh(c)
        return (h, c), h

    init = (jnp.zeros((N, H), jnp.float32), jnp.zeros((N, H), jnp.float32))
    _, hs = jax.lax.scan(step, init, x_tm)
    return hs


def basic_lstm_forward_ref(x, lengths, params, matmul_dtype=jnp.float32):
    N, L, D = x.shape
    h = jnp.transpose(x, (1, 0, 2)).astype(jnp.float32)
    for layer in params["lstm"]:
        h = _lstm_layer_ref(h, layer["w_ih_t"], layer["w_hh_t"], layer["b"],
                            matmul_dtype)
    last = h[lengths - 1, jnp.arange(N), :]
    return (jnp.dot(last.astype(matmul_dtype),
                    params["linear"]["w_t"].astype(matmul_dtype),
                    preferred_element_type=jnp.float32)
            + params["linear"]["b"])


# ----------------------------------------------------------------------------
# Deterministic parameter init (mirrors nn.LSTM / nn.Linear shapes & U(-k, k))
# ----------------------------------------------------------------------------
def init_params(key, input_dim, rnn_size, output_dim, num_layers):
    params = {"lstm": []}
    k_lstm = 1.0 / math.sqrt(rnn_size)
    for layer in range(num_layers):
        in_dim = input_dim if layer == 0 else rnn_size
        key, k1, k2, k3, k4 = jax.random.split(key, 5)
        w_ih = jax.random.uniform(k1, (4 * rnn_size, in_dim), jnp.float32,
                                  -k_lstm, k_lstm)
        w_hh = jax.random.uniform(k2, (4 * rnn_size, rnn_size), jnp.float32,
                                  -k_lstm, k_lstm)
        b_ih = jax.random.uniform(k3, (4 * rnn_size,), jnp.float32, -k_lstm, k_lstm)
        b_hh = jax.random.uniform(k4, (4 * rnn_size,), jnp.float32, -k_lstm, k_lstm)
        params["lstm"].append({
            "w_ih_t": w_ih.T,                  # (in_dim, 4H)
            "w_hh_t": w_hh.T,                  # (H, 4H)
            "b": (b_ih + b_hh)[None, :],       # (1, 4H)
        })
    feature_size = rnn_size  # bidirectional=False
    k_lin = 1.0 / math.sqrt(feature_size)
    key, k1, k2 = jax.random.split(key, 3)
    w = jax.random.uniform(k1, (output_dim, feature_size), jnp.float32,
                           -k_lin, k_lin)
    b = jax.random.uniform(k2, (output_dim,), jnp.float32, -k_lin, k_lin)
    params["linear"] = {"w_t": w.T, "b": b[None, :]}
    return params


# ----------------------------------------------------------------------------
if __name__ == "__main__":
    # Small, module-consistent shapes. N=16 -> two batch tiles of 8 rows, which
    # exercises the "parallel" batch-tile grid axis; 4H = 128 lanes.
    N, L, D = 16, 8, 16             # batch, seq len, input feature dim
    H, OUT, NUM_LAYERS = 32, 8, 2   # rnn_size, output_dim, num_layers

    key = jax.random.PRNGKey(0)
    key, kx = jax.random.split(key)
    x = jax.random.normal(kx, (N, L, D), jnp.float32)
    # pack_padded_sequence requires descending, nonzero lengths.
    lengths = jnp.array([8, 8, 8, 7, 7, 6, 6, 5, 5, 4, 4, 3, 3, 2, 2, 1],
                        dtype=jnp.int32)

    params = init_params(key, D, H, OUT, NUM_LAYERS)

    out = basic_lstm_forward(x, lengths, params)
    out = jax.block_until_ready(out)
    assert out.shape == (N, OUT), out.shape

    # Tight check against a reference using the same bf16 matmul operands
    # (f32 accumulation), loose check against the pure-f32 module semantics.
    ref_bf16 = basic_lstm_forward_ref(x, lengths, params,
                                      matmul_dtype=jnp.bfloat16)
    ref_f32 = basic_lstm_forward_ref(x, lengths, params,
                                     matmul_dtype=jnp.float32)
    err_bf = float(jnp.max(jnp.abs(out - ref_bf16)))
    err_f32 = float(jnp.max(jnp.abs(out - ref_f32)))
    assert jnp.allclose(out, ref_bf16, atol=5e-3, rtol=5e-3), err_bf
    assert jnp.allclose(out, ref_f32, atol=5e-2, rtol=5e-2), err_f32

    print("KERNEL_OK")
</pallas_src>

<mosaic_0001>
module attributes {stable_mosaic.version = 11 : i64} {
  func.func @_fused_lstm_kernel(%arg0: i32, %arg1: memref<1x64x16xbf16, #tpu.memory_space<vmem>>, %arg2: memref<1x8x1xi32, #tpu.memory_space<vmem>>, %arg3: memref<16x128xbf16, #tpu.memory_space<vmem>>, %arg4: memref<32x128xbf16, #tpu.memory_space<vmem>>, %arg5: memref<1x128xf32, #tpu.memory_space<vmem>>, %arg6: memref<32x128xbf16, #tpu.memory_space<vmem>>, %arg7: memref<32x128xbf16, #tpu.memory_space<vmem>>, %arg8: memref<1x128xf32, #tpu.memory_space<vmem>>, %arg9: memref<32x8xbf16, #tpu.memory_space<vmem>>, %arg10: memref<1x8xf32, #tpu.memory_space<vmem>>, %arg11: memref<8x8xf32, #tpu.memory_space<vmem>>, %arg12: memref<64x128xf32, #tpu.memory_space<vmem>>, %arg13: memref<64x32xf32, #tpu.memory_space<vmem>>) attributes {dimension_semantics = [#tpu.dimension_semantics<parallel>], iteration_bounds = array<i64: 2>, scalar_prefetch = 0 : i64, scratch_operands = 2 : i64, tpu.core_type = #tpu.core_type<tc>, window_params = [{transform_indices = @transform_0, window_bounds = array<i64: 1, 64, 16>}, {transform_indices = @transform_1, window_bounds = array<i64: 1, 8, 1>}, {pipeline_mode = #tpu.pipeline_mode<synchronous>, transform_indices = @transform_2, window_bounds = array<i64: 16, 128>}, {pipeline_mode = #tpu.pipeline_mode<synchronous>, transform_indices = @transform_3, window_bounds = array<i64: 32, 128>}, {pipeline_mode = #tpu.pipeline_mode<synchronous>, transform_indices = @transform_4, window_bounds = array<i64: 1, 128>}, {pipeline_mode = #tpu.pipeline_mode<synchronous>, transform_indices = @transform_5, window_bounds = array<i64: 32, 128>}, {pipeline_mode = #tpu.pipeline_mode<synchronous>, transform_indices = @transform_6, window_bounds = array<i64: 32, 128>}, {pipeline_mode = #tpu.pipeline_mode<synchronous>, transform_indices = @transform_7, window_bounds = array<i64: 1, 128>}, {pipeline_mode = #tpu.pipeline_mode<synchronous>, transform_indices = @transform_8, window_bounds = array<i64: 32, 8>}, {pipeline_mode = #tpu.pipeline_mode<synchronous>, transform_indices = @transform_9, window_bounds = array<i64: 1, 8>}, {transform_indices = @transform_10, window_bounds = array<i64: 8, 8>}]} {
    %c0 = arith.constant 0 : index
    %c0_0 = arith.constant 0 : index
    %c0_1 = arith.constant 0 : index
    %0 = vector.load %arg2[%c0, %c0_0, %c0_1] : memref<1x8x1xi32, #tpu.memory_space<vmem>>, vector<1x8x1xi32>
    %1 = vector.shape_cast %0 : vector<1x8x1xi32> to vector<8x1xi32>
    %2 = tpu.iota {dimensions = array<i32: 1>} : vector<8x128xi32>
    %c64_i32 = arith.constant 64 : i32
    %3 = vector.broadcast %c64_i32 : i32 to vector<8x128xi32>
    %4 = arith.cmpi sge, %2, %3 : vector<8x128xi32>
    %c96_i32 = arith.constant 96 : i32
    %5 = vector.broadcast %c96_i32 : i32 to vector<8x128xi32>
    %6 = arith.cmpi slt, %2, %5 : vector<8x128xi32>
    %7 = arith.andi %4, %6 : vector<8x128xi1>
    %cst = arith.constant 1.000000e+00 : f32
    %cst_2 = arith.constant 5.000000e-01 : f32
    %8 = vector.broadcast %cst : f32 to vector<8x128xf32>
    %9 = vector.broadcast %cst_2 : f32 to vector<8x128xf32>
    %10 = arith.select %7, %8, %9 : vector<8x128xi1>, vector<8x128xf32>
    %cst_3 = arith.constant 0.000000e+00 : f32
    %cst_4 = arith.constant 5.000000e-01 : f32
    %11 = vector.broadcast %cst_3 : f32 to vector<8x128xf32>
    %12 = vector.broadcast %cst_4 : f32 to vector<8x128xf32>
    %13 = arith.select %7, %11, %12 : vector<8x128xi1>, vector<8x128xf32>
    %c0_5 = arith.constant 0 : index
    %c0_6 = arith.constant 0 : index
    %c0_7 = arith.constant 0 : index
    %14 = vector.load %arg1[%c0_5, %c0_6, %c0_7] : memref<1x64x16xbf16, #tpu.memory_space<vmem>>, vector<1x64x16xbf16>
    %15 = vector.shape_cast %14 : vector<1x64x16xbf16> to vector<64x16xbf16>
    %c0_8 = arith.constant 0 : index
    %c0_9 = arith.constant 0 : index
    %16 = vector.load %arg3[%c0_8, %c0_9] : memref<16x128xbf16, #tpu.memory_space<vmem>>, vector<16x128xbf16>
    %cst_10 = arith.constant dense<0.000000e+00> : vector<64x128xf32>
    %17 = tpu.matmul %15, %16, %cst_10 {dimension_numbers = #tpu.dot_dimension_numbers<[1], [0], [0], [1], [0, 0, 1, 1], [], []>} : vector<64x16xbf16>, vector<16x128xbf16>, vector<64x128xf32> -> vector<64x128xf32>
    %c0_11 = arith.constant 0 : index
    %c0_12 = arith.constant 0 : index
    %18 = vector.load %arg5[%c0_11, %c0_12] : memref<1x128xf32, #tpu.memory_space<vmem>>, vector<1x128xf32>
    %19 = vector.broadcast %18 : vector<1x128xf32> to vector<64x128xf32>
    %20 = arith.addf %17, %19 : vector<64x128xf32>
    %c0_13 = arith.constant 0 : index
    %c0_14 = arith.constant 0 : index
    %21 = vector.load %arg12[%c0_13, %c0_14] : memref<64x128xf32, #tpu.memory_space<vmem>>, vector<64x128xf32>
    tpu.vector_store %arg12[%c0_13, %c0_14], %20 {strides = array<i32>} : memref<64x128xf32, #tpu.memory_space<vmem>>, vector<64x128xf32>,
    %c0_15 = arith.constant 0 : index
    %c0_16 = arith.constant 0 : index
    %22 = vector.load %arg4[%c0_15, %c0_16] : memref<32x128xbf16, #tpu.memory_space<vmem>>, vector<32x128xbf16>
    %cst_17 = arith.constant 0.000000e+00 : f32
    %23 = vector.broadcast %cst_17 : f32 to vector<8x32xf32>
    %c0_18 = arith.constant 0 : index
    %c0_19 = arith.constant 0 : index
    %24 = vector.load %arg12[%c0_18, %c0_19] : memref<64x128xf32, #tpu.memory_space<vmem>>, vector<8x128xf32>
    %25 = arith.mulf %24, %10 : vector<8x128xf32>
    %26 = math.tanh %25 : vector<8x128xf32>
    %27 = arith.mulf %26, %10 : vector<8x128xf32>
    %28 = arith.addf %27, %13 : vector<8x128xf32>
    %29 = vector.extract_strided_slice %28 {offsets = [0, 0], sizes = [8, 32], strides = [1, 1]} : vector<8x128xf32> to vector<8x32xf32>
    %30 = vector.extract_strided_slice %28 {offsets = [0, 32], sizes = [8, 32], strides = [1, 1]} : vector<8x128xf32> to vector<8x32xf32>
    %31 = vector.extract_strided_slice %28 {offsets = [0, 64], sizes = [8, 32], strides = [1, 1]} : vector<8x128xf32> to vector<8x32xf32>
    %32 = vector.extract_strided_slice %28 {offsets = [0, 96], sizes = [8, 32], strides = [1, 1]} : vector<8x128xf32> to vector<8x32xf32>
    %33 = arith.mulf %30, %23 : vector<8x32xf32>
    %34 = arith.mulf %29, %31 : vector<8x32xf32>
    %35 = arith.addf %33, %34 : vector<8x32xf32>
    %36 = math.tanh %35 : vector<8x32xf32>
    %37 = arith.mulf %32, %36 : vector<8x32xf32>
    %38 = arith.truncf %37 : vector<8x32xf32> to vector<8x32xbf16>
    %c0_20 = arith.constant 0 : index
    %c0_21 = arith.constant 0 : index
    %39 = vector.load %arg13[%c0_20, %c0_21] : memref<64x32xf32, #tpu.memory_space<vmem>>, vector<8x32xf32>
    tpu.vector_store %arg13[%c0_20, %c0_21], %37 {strides = array<i32>} : memref<64x32xf32, #tpu.memory_space<vmem>>, vector<8x32xf32>,
    %c8 = arith.constant 8 : index
    %c0_22 = arith.constant 0 : index
    %40 = vector.load %arg12[%c8, %c0_22] : memref<64x128xf32, #tpu.memory_space<vmem>>, vector<8x128xf32>
    %cst_23 = arith.constant dense<0.000000e+00> : vector<8x128xf32>
    %41 = tpu.matmul %38, %22, %cst_23 {dimension_numbers = #tpu.dot_dimension_numbers<[1], [0], [0], [1], [0, 0, 1, 1], [], []>} : vector<8x32xbf16>, vector<32x128xbf16>, vector<8x128xf32> -> vector<8x128xf32>
    %42 = arith.addf %40, %41 : vector<8x128xf32>
    %43 = arith.mulf %42, %10 : vector<8x128xf32>
    %44 = math.tanh %43 : vector<8x128xf32>
    %45 = arith.mulf %44, %10 : vector<8x128xf32>
    %46 = arith.addf %45, %13 : vector<8x128xf32>
    %47 = vector.extract_strided_slice %46 {offsets = [0, 0], sizes = [8, 32], strides = [1, 1]} : vector<8x128xf32> to vector<8x32xf32>
    %48 = vector.extract_strided_slice %46 {offsets = [0, 32], sizes = [8, 32], strides = [1, 1]} : vector<8x128xf32> to vector<8x32xf32>
    %49 = vector.extract_strided_slice %46 {offsets = [0, 64], sizes = [8, 32], strides = [1, 1]} : vector<8x128xf32> to vector<8x32xf32>
    %50 = vector.extract_strided_slice %46 {offsets = [0, 96], sizes = [8, 32], strides = [1, 1]} : vector<8x128xf32> to vector<8x32xf32>
    %51 = arith.mulf %48, %35 : vector<8x32xf32>
    %52 = arith.mulf %47, %49 : vector<8x32xf32>
    %53 = arith.addf %51, %52 : vector<8x32xf32>
    %54 = math.tanh %53 : vector<8x32xf32>
    %55 = arith.mulf %50, %54 : vector<8x32xf32>
    %56 = arith.truncf %55 : vector<8x32xf32> to vector<8x32xbf16>
    %c8_24 = arith.constant 8 : index
    %c0_25 = arith.constant 0 : index
    %57 = vector.load %arg13[%c8_24, %c0_25] : memref<64x32xf32, #tpu.memory_space<vmem>>, vector<8x32xf32>
    tpu.vector_store %arg13[%c8_24, %c0_25], %55 {strides = array<i32>} : memref<64x32xf32, #tpu.memory_space<vmem>>, vector<8x32xf32>,
    %c16 = arith.constant 16 : index
    %c0_26 = arith.constant 0 : index
    %58 = vector.load %arg12[%c16, %c0_26] : memref<64x128xf32, #tpu.memory_space<vmem>>, vector<8x128xf32>
    %cst_27 = arith.constant dense<0.000000e+00> : vector<8x128xf32>
    %59 = tpu.matmul %56, %22, %cst_27 {dimension_numbers = #tpu.dot_dimension_numbers<[1], [0], [0], [1], [0, 0, 1, 1], [], []>} : vector<8x32xbf16>, vector<32x128xbf16>, vector<8x128xf32> -> vector<8x128xf32>
    %60 = arith.addf %58, %59 : vector<8x128xf32>
    %61 = arith.mulf %60, %10 : vector<8x128xf32>
    %62 = math.tanh %61 : vector<8x128xf32>
    %63 = arith.mulf %62, %10 : vector<8x128xf32>
    %64 = arith.addf %63, %13 : vector<8x128xf32>
    %65 = vector.extract_strided_slice %64 {offsets = [0, 0], sizes = [8, 32], strides = [1, 1]} : vector<8x128xf32> to vector<8x32xf32>
    %66 = vector.extract_strided_slice %64 {offsets = [0, 32], sizes = [8, 32], strides = [1, 1]} : vector<8x128xf32> to vector<8x32xf32>
    %67 = vector.extract_strided_slice %64 {offsets = [0, 64], sizes = [8, 32], strides = [1, 1]} : vector<8x128xf32> to vector<8x32xf32>
    %68 = vector.extract_strided_slice %64 {offsets = [0, 96], sizes = [8, 32], strides = [1, 1]} : vector<8x128xf32> to vector<8x32xf32>
    %69 = arith.mulf %66, %53 : vector<8x32xf32>
    %70 = arith.mulf %65, %67 : vector<8x32xf32>
    %71 = arith.addf %69, %70 : vector<8x32xf32>
    %72 = math.tanh %71 : vector<8x32xf32>
    %73 = arith.mulf %68, %72 : vector<8x32xf32>
    %74 = arith.truncf %73 : vector<8x32xf32> to vector<8x32xbf16>
    %c16_28 = arith.constant 16 : index
    %c0_29 = arith.constant 0 : index
    %75 = vector.load %arg13[%c16_28, %c0_29] : memref<64x32xf32, #tpu.memory_space<vmem>>, vector<8x32xf32>
    tpu.vector_store %arg13[%c16_28, %c0_29], %73 {strides = array<i32>} : memref<64x32xf32, #tpu.memory_space<vmem>>, vector<8x32xf32>,
    %c24 = arith.constant 24 : index
    %c0_30 = arith.constant 0 : index
    %76 = vector.load %arg12[%c24, %c0_30] : memref<64x128xf32, #tpu.memory_space<vmem>>, vector<8x128xf32>
    %cst_31 = arith.constant dense<0.000000e+00> : vector<8x128xf32>
    %77 = tpu.matmul %74, %22, %cst_31 {dimension_numbers = #tpu.dot_dimension_numbers<[1], [0], [0], [1], [0, 0, 1, 1], [], []>} : vector<8x32xbf16>, vector<32x128xbf16>, vector<8x128xf32> -> vector<8x128xf32>
    %78 = arith.addf %76, %77 : vector<8x128xf32>
    %79 = arith.mulf %78, %10 : vector<8x128xf32>
    %80 = math.tanh %79 : vector<8x128xf32>
    %81 = arith.mulf %80, %10 : vector<8x128xf32>
    %82 = arith.addf %81, %13 : vector<8x128xf32>
    %83 = vector.extract_strided_slice %82 {offsets = [0, 0], sizes = [8, 32], strides = [1, 1]} : vector<8x128xf32> to vector<8x32xf32>
    %84 = vector.extract_strided_slice %82 {offsets = [0, 32], sizes = [8, 32], strides = [1, 1]} : vector<8x128xf32> to vector<8x32xf32>
    %85 = vector.extract_strided_slice %82 {offsets = [0, 64], sizes = [8, 32], strides = [1, 1]} : vector<8x128xf32> to vector<8x32xf32>
    %86 = vector.extract_strided_slice %82 {offsets = [0, 96], sizes = [8, 32], strides = [1, 1]} : vector<8x128xf32> to vector<8x32xf32>
    %87 = arith.mulf %84, %71 : vector<8x32xf32>
    %88 = arith.mulf %83, %85 : vector<8x32xf32>
    %89 = arith.addf %87, %88 : vector<8x32xf32>
    %90 = math.tanh %89 : vector<8x32xf32>
    %91 = arith.mulf %86, %90 : vector<8x32xf32>
    %92 = arith.truncf %91 : vector<8x32xf32> to vector<8x32xbf16>
    %c24_32 = arith.constant 24 : index
    %c0_33 = arith.constant 0 : index
    %93 = vector.load %arg13[%c24_32, %c0_33] : memref<64x32xf32, #tpu.memory_space<vmem>>, vector<8x32xf32>
    tpu.vector_store %arg13[%c24_32, %c0_33], %91 {strides = array<i32>} : memref<64x32xf32, #tpu.memory_space<vmem>>, vector<8x32xf32>,
    %c32 = arith.constant 32 : index
    %c0_34 = arith.constant 0 : index
    %94 = vector.load %arg12[%c32, %c0_34] : memref<64x128xf32, #tpu.memory_space<vmem>>, vector<8x128xf32>
    %cst_35 = arith.constant dense<0.000000e+00> : vector<8x128xf32>
    %95 = tpu.matmul %92, %22, %cst_35 {dimension_numbers = #tpu.dot_dimension_numbers<[1], [0], [0], [1], [0, 0, 1, 1], [], []>} : vector<8x32xbf16>, vector<32x128xbf16>, vector<8x128xf32> -> vector<8x128xf32>
    %96 = arith.addf %94, %95 : vector<8x128xf32>
    %97 = arith.mulf %96, %10 : vector<8x128xf32>
    %98 = math.tanh %97 : vector<8x128xf32>
    %99 = arith.mulf %98, %10 : vector<8x128xf32>
    %100 = arith.addf %99, %13 : vector<8x128xf32>
    %101 = vector.extract_strided_slice %100 {offsets = [0, 0], sizes = [8, 32], strides = [1, 1]} : vector<8x128xf32> to vector<8x32xf32>
    %102 = vector.extract_strided_slice %100 {offsets = [0, 32], sizes = [8, 32], strides = [1, 1]} : vector<8x128xf32> to vector<8x32xf32>
    %103 = vector.extract_strided_slice %100 {offsets = [0, 64], sizes = [8, 32], strides = [1, 1]} : vector<8x128xf32> to vector<8x32xf32>
    %104 = vector.extract_strided_slice %100 {offsets = [0, 96], sizes = [8, 32], strides = [1, 1]} : vector<8x128xf32> to vector<8x32xf32>
    %105 = arith.mulf %102, %89 : vector<8x32xf32>
    %106 = arith.mulf %101, %103 : vector<8x32xf32>
    %107 = arith.addf %105, %106 : vector<8x32xf32>
    %108 = math.tanh %107 : vector<8x32xf32>
    %109 = arith.mulf %104, %108 : vector<8x32xf32>
    %110 = arith.truncf %109 : vector<8x32xf32> to vector<8x32xbf16>
    %c32_36 = arith.constant 32 : index
    %c0_37 = arith.constant 0 : index
    %111 = vector.load %arg13[%c32_36, %c0_37] : memref<64x32xf32, #tpu.memory_space<vmem>>, vector<8x32xf32>
    tpu.vector_store %arg13[%c32_36, %c0_37], %109 {strides = array<i32>} : memref<64x32xf32, #tpu.memory_space<vmem>>, vector<8x32xf32>,
    %c40 = arith.constant 40 : index
    %c0_38 = arith.constant 0 : index
    %112 = vector.load %arg12[%c40, %c0_38] : memref<64x128xf32, #tpu.memory_space<vmem>>, vector<8x128xf32>
    %cst_39 = arith.constant dense<0.000000e+00> : vector<8x128xf32>
    %113 = tpu.matmul %110, %22, %cst_39 {dimension_numbers = #tpu.dot_dimension_numbers<[1], [0], [0], [1], [0, 0, 1, 1], [], []>} : vector<8x32xbf16>, vector<32x128xbf16>, vector<8x128xf32> -> vector<8x128xf32>
    %114 = arith.addf %112, %113 : vector<8x128xf32>
    %115 = arith.mulf %114, %10 : vector<8x128xf32>
    %116 = math.tanh %115 : vector<8x128xf32>
    %117 = arith.mulf %116, %10 : vector<8x128xf32>
    %118 = arith.addf %117, %13 : vector<8x128xf32>
    %119 = vector.extract_strided_slice %118 {offsets = [0, 0], sizes = [8, 32], strides = [1, 1]} : vector<8x128xf32> to vector<8x32xf32>
    %120 = vector.extract_strided_slice %118 {offsets = [0, 32], sizes = [8, 32], strides = [1, 1]} : vector<8x128xf32> to vector<8x32xf32>
    %121 = vector.extract_strided_slice %118 {offsets = [0, 64], sizes = [8, 32], strides = [1, 1]} : vector<8x128xf32> to vector<8x32xf32>
    %122 = vector.extract_strided_slice %118 {offsets = [0, 96], sizes = [8, 32], strides = [1, 1]} : vector<8x128xf32> to vector<8x32xf32>
    %123 = arith.mulf %120, %107 : vector<8x32xf32>
    %124 = arith.mulf %119, %121 : vector<8x32xf32>
    %125 = arith.addf %123, %124 : vector<8x32xf32>
    %126 = math.tanh %125 : vector<8x32xf32>
    %127 = arith.mulf %122, %126 : vector<8x32xf32>
    %128 = arith.truncf %127 : vector<8x32xf32> to vector<8x32xbf16>
    %c40_40 = arith.constant 40 : index
    %c0_41 = arith.constant 0 : index
    %129 = vector.load %arg13[%c40_40, %c0_41] : memref<64x32xf32, #tpu.memory_space<vmem>>, vector<8x32xf32>
    tpu.vector_store %arg13[%c40_40, %c0_41], %127 {strides = array<i32>} : memref<64x32xf32, #tpu.memory_space<vmem>>, vector<8x32xf32>,
    %c48 = arith.constant 48 : index
    %c0_42 = arith.constant 0 : index
    %130 = vector.load %arg12[%c48, %c0_42] : memref<64x128xf32, #tpu.memory_space<vmem>>, vector<8x128xf32>
    %cst_43 = arith.constant dense<0.000000e+00> : vector<8x128xf32>
    %131 = tpu.matmul %128, %22, %cst_43 {dimension_numbers = #tpu.dot_dimension_numbers<[1], [0], [0], [1], [0, 0, 1, 1], [], []>} : vector<8x32xbf16>, vector<32x128xbf16>, vector<8x128xf32> -> vector<8x128xf32>
    %132 = arith.addf %130, %131 : vector<8x128xf32>
    %133 = arith.mulf %132, %10 : vector<8x128xf32>
    %134 = math.tanh %133 : vector<8x128xf32>
    %135 = arith.mulf %134, %10 : vector<8x128xf32>
    %136 = arith.addf %135, %13 : vector<8x128xf32>
    %137 = vector.extract_strided_slice %136 {offsets = [0, 0], sizes = [8, 32], strides = [1, 1]} : vector<8x128xf32> to vector<8x32xf32>
    %138 = vector.extract_strided_slice %136 {offsets = [0, 32], sizes = [8, 32], strides = [1, 1]} : vector<8x128xf32> to vector<8x32xf32>
    %139 = vector.extract_strided_slice %136 {offsets = [0, 64], sizes = [8, 32], strides = [1, 1]} : vector<8x128xf32> to vector<8x32xf32>
    %140 = vector.extract_strided_slice %136 {offsets = [0, 96], sizes = [8, 32], strides = [1, 1]} : vector<8x128xf32> to vector<8x32xf32>
    %141 = arith.mulf %138, %125 : vector<8x32xf32>
    %142 = arith.mulf %137, %139 : vector<8x32xf32>
    %143 = arith.addf %141, %142 : vector<8x32xf32>
    %144 = math.tanh %143 : vector<8x32xf32>
    %145 = arith.mulf %140, %144 : vector<8x32xf32>
    %146 = arith.truncf %145 : vector<8x32xf32> to vector<8x32xbf16>
    %c48_44 = arith.constant 48 : index
    %c0_45 = arith.constant 0 : index
    %147 = vector.load %arg13[%c48_44, %c0_45] : memref<64x32xf32, #tpu.memory_space<vmem>>, vector<8x32xf32>
    tpu.vector_store %arg13[%c48_44, %c0_45], %145 {strides = array<i32>} : memref<64x32xf32, #tpu.memory_space<vmem>>, vector<8x32xf32>,
    %c56 = arith.constant 56 : index
    %c0_46 = arith.constant 0 : index
    %148 = vector.load %arg12[%c56, %c0_46] : memref<64x128xf32, #tpu.memory_space<vmem>>, vector<8x128xf32>
    %cst_47 = arith.constant dense<0.000000e+00> : vector<8x128xf32>
    %149 = tpu.matmul %146, %22, %cst_47 {dimension_numbers = #tpu.dot_dimension_numbers<[1], [0], [0], [1], [0, 0, 1, 1], [], []>} : vector<8x32xbf16>, vector<32x128xbf16>, vector<8x128xf32> -> vector<8x128xf32>
    %150 = arith.addf %148, %149 : vector<8x128xf32>
    %151 = arith.mulf %150, %10 : vector<8x128xf32>
    %152 = math.tanh %151 : vector<8x128xf32>
    %153 = arith.mulf %152, %10 : vector<8x128xf32>
    %154 = arith.addf %153, %13 : vector<8x128xf32>
    %155 = vector.extract_strided_slice %154 {offsets = [0, 0], sizes = [8, 32], strides = [1, 1]} : vector<8x128xf32> to vector<8x32xf32>
    %156 = vector.extract_strided_slice %154 {offsets = [0, 32], sizes = [8, 32], strides = [1, 1]} : vector<8x128xf32> to vector<8x32xf32>
    %157 = vector.extract_strided_slice %154 {offsets = [0, 64], sizes = [8, 32], strides = [1, 1]} : vector<8x128xf32> to vector<8x32xf32>
    %158 = vector.extract_strided_slice %154 {offsets = [0, 96], sizes = [8, 32], strides = [1, 1]} : vector<8x128xf32> to vector<8x32xf32>
    %159 = arith.mulf %156, %143 : vector<8x32xf32>
    %160 = arith.mulf %155, %157 : vector<8x32xf32>
    %161 = arith.addf %159, %160 : vector<8x32xf32>
    %162 = math.tanh %161 : vector<8x32xf32>
    %163 = arith.mulf %158, %162 : vector<8x32xf32>
    %c56_48 = arith.constant 56 : index
    %c0_49 = arith.constant 0 : index
    %164 = vector.load %arg13[%c56_48, %c0_49] : memref<64x32xf32, #tpu.memory_space<vmem>>, vector<8x32xf32>
    tpu.vector_store %arg13[%c56_48, %c0_49], %163 {strides = array<i32>} : memref<64x32xf32, #tpu.memory_space<vmem>>, vector<8x32xf32>,
    %c0_50 = arith.constant 0 : index
    %c0_51 = arith.constant 0 : index
    %165 = vector.load %arg6[%c0_50, %c0_51] : memref<32x128xbf16, #tpu.memory_space<vmem>>, vector<32x128xbf16>
    %c0_52 = arith.constant 0 : index
    %c0_53 = arith.constant 0 : index
    %166 = vector.load %arg8[%c0_52, %c0_53] : memref<1x128xf32, #tpu.memory_space<vmem>>, vector<1x128xf32>
    %c0_54 = arith.constant 0 : index
    %c0_55 = arith.constant 0 : index
    %167 = vector.load %arg13[%c0_54, %c0_55] : memref<64x32xf32, #tpu.memory_space<vmem>>, vector<64x32xf32>
    %168 = arith.truncf %167 : vector<64x32xf32> to vector<64x32xbf16>
    %cst_56 = arith.constant dense<0.000000e+00> : vector<64x128xf32>
    %169 = tpu.matmul %168, %165, %cst_56 {dimension_numbers = #tpu.dot_dimension_numbers<[1], [0], [0], [1], [0, 0, 1, 1], [], []>} : vector<64x32xbf16>, vector<32x128xbf16>, vector<64x128xf32> -> vector<64x128xf32>
    %170 = vector.broadcast %166 : vector<1x128xf32> to vector<64x128xf32>
    %171 = arith.addf %169, %170 : vector<64x128xf32>
    %c0_57 = arith.constant 0 : index
    %c0_58 = arith.constant 0 : index
    %172 = vector.load %arg12[%c0_57, %c0_58] : memref<64x128xf32, #tpu.memory_space<vmem>>, vector<64x128xf32>
    tpu.vector_store %arg12[%c0_57, %c0_58], %171 {strides = array<i32>} : memref<64x128xf32, #tpu.memory_space<vmem>>, vector<64x128xf32>,
    %c0_59 = arith.constant 0 : index
    %c0_60 = arith.constant 0 : index
    %173 = vector.load %arg7[%c0_59, %c0_60] : memref<32x128xbf16, #tpu.memory_space<vmem>>, vector<32x128xbf16>
    %cst_61 = arith.constant 0.000000e+00 : f32
    %174 = vector.broadcast %cst_61 : f32 to vector<8x32xf32>
    %c0_62 = arith.constant 0 : index
    %c0_63 = arith.constant 0 : index
    %175 = vector.load %arg12[%c0_62, %c0_63] : memref<64x128xf32, #tpu.memory_space<vmem>>, vector<8x128xf32>
    %176 = arith.mulf %175, %10 : vector<8x128xf32>
    %177 = math.tanh %176 : vector<8x128xf32>
    %178 = arith.mulf %177, %10 : vector<8x128xf32>
    %179 = arith.addf %178, %13 : vector<8x128xf32>
    %180 = vector.extract_strided_slice %179 {offsets = [0, 0], sizes = [8, 32], strides = [1, 1]} : vector<8x128xf32> to vector<8x32xf32>
    %181 = vector.extract_strided_slice %179 {offsets = [0, 32], sizes = [8, 32], strides = [1, 1]} : vector<8x128xf32> to vector<8x32xf32>
    %182 = vector.extract_strided_slice %179 {offsets = [0, 64], sizes = [8, 32], strides = [1, 1]} : vector<8x128xf32> to vector<8x32xf32>
    %183 = vector.extract_strided_slice %179 {offsets = [0, 96], sizes = [8, 32], strides = [1, 1]} : vector<8x128xf32> to vector<8x32xf32>
    %184 = arith.mulf %181, %174 : vector<8x32xf32>
    %185 = arith.mulf %180, %182 : vector<8x32xf32>
    %186 = arith.addf %184, %185 : vector<8x32xf32>
    %187 = math.tanh %186 : vector<8x32xf32>
    %188 = arith.mulf %183, %187 : vector<8x32xf32>
    %189 = arith.truncf %188 : vector<8x32xf32> to vector<8x32xbf16>
    %c0_64 = arith.constant 0 : index
    %c0_65 = arith.constant 0 : index
    %190 = vector.load %arg13[%c0_64, %c0_65] : memref<64x32xf32, #tpu.memory_space<vmem>>, vector<8x32xf32>
    tpu.vector_store %arg13[%c0_64, %c0_65], %188 {strides = array<i32>} : memref<64x32xf32, #tpu.memory_space<vmem>>, vector<8x32xf32>,
    %c8_66 = arith.constant 8 : index
    %c0_67 = arith.constant 0 : index
    %191 = vector.load %arg12[%c8_66, %c0_67] : memref<64x128xf32, #tpu.memory_space<vmem>>, vector<8x128xf32>
    %cst_68 = arith.constant dense<0.000000e+00> : vector<8x128xf32>
    %192 = tpu.matmul %189, %173, %cst_68 {dimension_numbers = #tpu.dot_dimension_numbers<[1], [0], [0], [1], [0, 0, 1, 1], [], []>} : vector<8x32xbf16>, vector<32x128xbf16>, vector<8x128xf32> -> vector<8x128xf32>
    %193 = arith.addf %191, %192 : vector<8x128xf32>
    %194 = arith.mulf %193, %10 : vector<8x128xf32>
    %195 = math.tanh %194 : vector<8x128xf32>
    %196 = arith.mulf %195, %10 : vector<8x128xf32>
    %197 = arith.addf %196, %13 : vector<8x128xf32>
    %198 = vector.extract_strided_slice %197 {offsets = [0, 0], sizes = [8, 32], strides = [1, 1]} : vector<8x128xf32> to vector<8x32xf32>
    %199 = vector.extract_strided_slice %197 {offsets = [0, 32], sizes = [8, 32], strides = [1, 1]} : vector<8x128xf32> to vector<8x32xf32>
    %200 = vector.extract_strided_slice %197 {offsets = [0, 64], sizes = [8, 32], strides = [1, 1]} : vector<8x128xf32> to vector<8x32xf32>
    %201 = vector.extract_strided_slice %197 {offsets = [0, 96], sizes = [8, 32], strides = [1, 1]} : vector<8x128xf32> to vector<8x32xf32>
    %202 = arith.mulf %199, %186 : vector<8x32xf32>
    %203 = arith.mulf %198, %200 : vector<8x32xf32>
    %204 = arith.addf %202, %203 : vector<8x32xf32>
    %205 = math.tanh %204 : vector<8x32xf32>
    %206 = arith.mulf %201, %205 : vector<8x32xf32>
    %207 = arith.truncf %206 : vector<8x32xf32> to vector<8x32xbf16>
    %c8_69 = arith.constant 8 : index
    %c0_70 = arith.constant 0 : index
    %208 = vector.load %arg13[%c8_69, %c0_70] : memref<64x32xf32, #tpu.memory_space<vmem>>, vector<8x32xf32>
    tpu.vector_store %arg13[%c8_69, %c0_70], %206 {strides = array<i32>} : memref<64x32xf32, #tpu.memory_space<vmem>>, vector<8x32xf32>,
    %c16_71 = arith.constant 16 : index
    %c0_72 = arith.constant 0 : index
    %209 = vector.load %arg12[%c16_71, %c0_72] : memref<64x128xf32, #tpu.memory_space<vmem>>, vector<8x128xf32>
    %cst_73 = arith.constant dense<0.000000e+00> : vector<8x128xf32>
    %210 = tpu.matmul %207, %173, %cst_73 {dimension_numbers = #tpu.dot_dimension_numbers<[1], [0], [0], [1], [0, 0, 1, 1], [], []>} : vector<8x32xbf16>, vector<32x128xbf16>, vector<8x128xf32> -> vector<8x128xf32>
    %211 = arith.addf %209, %210 : vector<8x128xf32>
    %212 = arith.mulf %211, %10 : vector<8x128xf32>
    %213 = math.tanh %212 : vector<8x128xf32>
    %214 = arith.mulf %213, %10 : vector<8x128xf32>
    %215 = arith.addf %214, %13 : vector<8x128xf32>
    %216 = vector.extract_strided_slice %215 {offsets = [0, 0], sizes = [8, 32], strides = [1, 1]} : vector<8x128xf32> to vector<8x32xf32>
    %217 = vector.extract_strided_slice %215 {offsets = [0, 32], sizes = [8, 32], strides = [1, 1]} : vector<8x128xf32> to vector<8x32xf32>
    %218 = vector.extract_strided_slice %215 {offsets = [0, 64], sizes = [8, 32], strides = [1, 1]} : vector<8x128xf32> to vector<8x32xf32>
    %219 = vector.extract_strided_slice %215 {offsets = [0, 96], sizes = [8, 32], strides = [1, 1]} : vector<8x128xf32> to vector<8x32xf32>
    %220 = arith.mulf %217, %204 : vector<8x32xf32>
    %221 = arith.mulf %216, %218 : vector<8x32xf32>
    %222 = arith.addf %220, %221 : vector<8x32xf32>
    %223 = math.tanh %222 : vector<8x32xf32>
    %224 = arith.mulf %219, %223 : vector<8x32xf32>
    %225 = arith.truncf %224 : vector<8x32xf32> to vector<8x32xbf16>
    %c16_74 = arith.constant 16 : index
    %c0_75 = arith.constant 0 : index
    %226 = vector.load %arg13[%c16_74, %c0_75] : memref<64x32xf32, #tpu.memory_space<vmem>>, vector<8x32xf32>
    tpu.vector_store %arg13[%c16_74, %c0_75], %224 {strides = array<i32>} : memref<64x32xf32, #tpu.memory_space<vmem>>, vector<8x32xf32>,
    %c24_76 = arith.constant 24 : index
    %c0_77 = arith.constant 0 : index
    %227 = vector.load %arg12[%c24_76, %c0_77] : memref<64x128xf32, #tpu.memory_space<vmem>>, vector<8x128xf32>
    %cst_78 = arith.constant dense<0.000000e+00> : vector<8x128xf32>
    %228 = tpu.matmul %225, %173, %cst_78 {dimension_numbers = #tpu.dot_dimension_numbers<[1], [0], [0], [1], [0, 0, 1, 1], [], []>} : vector<8x32xbf16>, vector<32x128xbf16>, vector<8x128xf32> -> vector<8x128xf32>
    %229 = arith.addf %227, %228 : vector<8x128xf32>
    %230 = arith.mulf %229, %10 : vector<8x128xf32>
    %231 = math.tanh %230 : vector<8x128xf32>
    %232 = arith.mulf %231, %10 : vector<8x128xf32>
    %233 = arith.addf %232, %13 : vector<8x128xf32>
    %234 = vector.extract_strided_slice %233 {offsets = [0, 0], sizes = [8, 32], strides = [1, 1]} : vector<8x128xf32> to vector<8x32xf32>
    %235 = vector.extract_strided_slice %233 {offsets = [0, 32], sizes = [8, 32], strides = [1, 1]} : vector<8x128xf32> to vector<8x32xf32>
    %236 = vector.extract_strided_slice %233 {offsets = [0, 64], sizes = [8, 32], strides = [1, 1]} : vector<8x128xf32> to vector<8x32xf32>
    %237 = vector.extract_strided_slice %233 {offsets = [0, 96], sizes = [8, 32], strides = [1, 1]} : vector<8x128xf32> to vector<8x32xf32>
    %238 = arith.mulf %235, %222 : vector<8x32xf32>
    %239 = arith.mulf %234, %236 : vector<8x32xf32>
    %240 = arith.addf %238, %239 : vector<8x32xf32>
    %241 = math.tanh %240 : vector<8x32xf32>
    %242 = arith.mulf %237, %241 : vector<8x32xf32>
    %243 = arith.truncf %242 : vector<8x32xf32> to vector<8x32xbf16>
    %c24_79 = arith.constant 24 : index
    %c0_80 = arith.constant 0 : index
    %244 = vector.load %arg13[%c24_79, %c0_80] : memref<64x32xf32, #tpu.memory_space<vmem>>, vector<8x32xf32>
    tpu.vector_store %arg13[%c24_79, %c0_80], %242 {strides = array<i32>} : memref<64x32xf32, #tpu.memory_space<vmem>>, vector<8x32xf32>,
    %c32_81 = arith.constant 32 : index
    %c0_82 = arith.constant 0 : index
    %245 = vector.load %arg12[%c32_81, %c0_82] : memref<64x128xf32, #tpu.memory_space<vmem>>, vector<8x128xf32>
    %cst_83 = arith.constant dense<0.000000e+00> : vector<8x128xf32>
    %246 = tpu.matmul %243, %173, %cst_83 {dimension_numbers = #tpu.dot_dimension_numbers<[1], [0], [0], [1], [0, 0, 1, 1], [], []>} : vector<8x32xbf16>, vector<32x128xbf16>, vector<8x128xf32> -> vector<8x128xf32>
    %247 = arith.addf %245, %246 : vector<8x128xf32>
    %248 = arith.mulf %247, %10 : vector<8x128xf32>
    %249 = math.tanh %248 : vector<8x128xf32>
    %250 = arith.mulf %249, %10 : vector<8x128xf32>
    %251 = arith.addf %250, %13 : vector<8x128xf32>
    %252 = vector.extract_strided_slice %251 {offsets = [0, 0], sizes = [8, 32], strides = [1, 1]} : vector<8x128xf32> to vector<8x32xf32>
    %253 = vector.extract_strided_slice %251 {offsets = [0, 32], sizes = [8, 32], strides = [1, 1]} : vector<8x128xf32> to vector<8x32xf32>
    %254 = vector.extract_strided_slice %251 {offsets = [0, 64], sizes = [8, 32], strides = [1, 1]} : vector<8x128xf32> to vector<8x32xf32>
    %255 = vector.extract_strided_slice %251 {offsets = [0, 96], sizes = [8, 32], strides = [1, 1]} : vector<8x128xf32> to vector<8x32xf32>
    %256 = arith.mulf %253, %240 : vector<8x32xf32>
    %257 = arith.mulf %252, %254 : vector<8x32xf32>
    %258 = arith.addf %256, %257 : vector<8x32xf32>
    %259 = math.tanh %258 : vector<8x32xf32>
    %260 = arith.mulf %255, %259 : vector<8x32xf32>
    %261 = arith.truncf %260 : vector<8x32xf32> to vector<8x32xbf16>
    %c32_84 = arith.constant 32 : index
    %c0_85 = arith.constant 0 : index
    %262 = vector.load %arg13[%c32_84, %c0_85] : memref<64x32xf32, #tpu.memory_space<vmem>>, vector<8x32xf32>
    tpu.vector_store %arg13[%c32_84, %c0_85], %260 {strides = array<i32>} : memref<64x32xf32, #tpu.memory_space<vmem>>, vector<8x32xf32>,
    %c40_86 = arith.constant 40 : index
    %c0_87 = arith.constant 0 : index
    %263 = vector.load %arg12[%c40_86, %c0_87] : memref<64x128xf32, #tpu.memory_space<vmem>>, vector<8x128xf32>
    %cst_88 = arith.constant dense<0.000000e+00> : vector<8x128xf32>
    %264 = tpu.matmul %261, %173, %cst_88 {dimension_numbers = #tpu.dot_dimension_numbers<[1], [0], [0], [1], [0, 0, 1, 1], [], []>} : vector<8x32xbf16>, vector<32x128xbf16>, vector<8x128xf32> -> vector<8x128xf32>
    %265 = arith.addf %263, %264 : vector<8x128xf32>
    %266 = arith.mulf %265, %10 : vector<8x128xf32>
    %267 = math.tanh %266 : vector<8x128xf32>
    %268 = arith.mulf %267, %10 : vector<8x128xf32>
    %269 = arith.addf %268, %13 : vector<8x128xf32>
    %270 = vector.extract_strided_slice %269 {offsets = [0, 0], sizes = [8, 32], strides = [1, 1]} : vector<8x128xf32> to vector<8x32xf32>
    %271 = vector.extract_strided_slice %269 {offsets = [0, 32], sizes = [8, 32], strides = [1, 1]} : vector<8x128xf32> to vector<8x32xf32>
    %272 = vector.extract_strided_slice %269 {offsets = [0, 64], sizes = [8, 32], strides = [1, 1]} : vector<8x128xf32> to vector<8x32xf32>
    %273 = vector.extract_strided_slice %269 {offsets = [0, 96], sizes = [8, 32], strides = [1, 1]} : vector<8x128xf32> to vector<8x32xf32>
    %274 = arith.mulf %271, %258 : vector<8x32xf32>
    %275 = arith.mulf %270, %272 : vector<8x32xf32>
    %276 = arith.addf %274, %275 : vector<8x32xf32>
    %277 = math.tanh %276 : vector<8x32xf32>
    %278 = arith.mulf %273, %277 : vector<8x32xf32>
    %279 = arith.truncf %278 : vector<8x32xf32> to vector<8x32xbf16>
    %c40_89 = arith.constant 40 : index
    %c0_90 = arith.constant 0 : index
    %280 = vector.load %arg13[%c40_89, %c0_90] : memref<64x32xf32, #tpu.memory_space<vmem>>, vector<8x32xf32>
    tpu.vector_store %arg13[%c40_89, %c0_90], %278 {strides = array<i32>} : memref<64x32xf32, #tpu.memory_space<vmem>>, vector<8x32xf32>,
    %c48_91 = arith.constant 48 : index
    %c0_92 = arith.constant 0 : index
    %281 = vector.load %arg12[%c48_91, %c0_92] : memref<64x128xf32, #tpu.memory_space<vmem>>, vector<8x128xf32>
    %cst_93 = arith.constant dense<0.000000e+00> : vector<8x128xf32>
    %282 = tpu.matmul %279, %173, %cst_93 {dimension_numbers = #tpu.dot_dimension_numbers<[1], [0], [0], [1], [0, 0, 1, 1], [], []>} : vector<8x32xbf16>, vector<32x128xbf16>, vector<8x128xf32> -> vector<8x128xf32>
    %283 = arith.addf %281, %282 : vector<8x128xf32>
    %284 = arith.mulf %283, %10 : vector<8x128xf32>
    %285 = math.tanh %284 : vector<8x128xf32>
    %286 = arith.mulf %285, %10 : vector<8x128xf32>
    %287 = arith.addf %286, %13 : vector<8x128xf32>
    %288 = vector.extract_strided_slice %287 {offsets = [0, 0], sizes = [8, 32], strides = [1, 1]} : vector<8x128xf32> to vector<8x32xf32>
    %289 = vector.extract_strided_slice %287 {offsets = [0, 32], sizes = [8, 32], strides = [1, 1]} : vector<8x128xf32> to vector<8x32xf32>
    %290 = vector.extract_strided_slice %287 {offsets = [0, 64], sizes = [8, 32], strides = [1, 1]} : vector<8x128xf32> to vector<8x32xf32>
    %291 = vector.extract_strided_slice %287 {offsets = [0, 96], sizes = [8, 32], strides = [1, 1]} : vector<8x128xf32> to vector<8x32xf32>
    %292 = arith.mulf %289, %276 : vector<8x32xf32>
    %293 = arith.mulf %288, %290 : vector<8x32xf32>
    %294 = arith.addf %292, %293 : vector<8x32xf32>
    %295 = math.tanh %294 : vector<8x32xf32>
    %296 = arith.mulf %291, %295 : vector<8x32xf32>
    %297 = arith.truncf %296 : vector<8x32xf32> to vector<8x32xbf16>
    %c48_94 = arith.constant 48 : index
    %c0_95 = arith.constant 0 : index
    %298 = vector.load %arg13[%c48_94, %c0_95] : memref<64x32xf32, #tpu.memory_space<vmem>>, vector<8x32xf32>
    tpu.vector_store %arg13[%c48_94, %c0_95], %296 {strides = array<i32>} : memref<64x32xf32, #tpu.memory_space<vmem>>, vector<8x32xf32>,
    %c56_96 = arith.constant 56 : index
    %c0_97 = arith.constant 0 : index
    %299 = vector.load %arg12[%c56_96, %c0_97] : memref<64x128xf32, #tpu.memory_space<vmem>>, vector<8x128xf32>
    %cst_98 = arith.constant dense<0.000000e+00> : vector<8x128xf32>
    %300 = tpu.matmul %297, %173, %cst_98 {dimension_numbers = #tpu.dot_dimension_numbers<[1], [0], [0], [1], [0, 0, 1, 1], [], []>} : vector<8x32xbf16>, vector<32x128xbf16>, vector<8x128xf32> -> vector<8x128xf32>
    %301 = arith.addf %299, %300 : vector<8x128xf32>
    %302 = arith.mulf %301, %10 : vector<8x128xf32>
    %303 = math.tanh %302 : vector<8x128xf32>
    %304 = arith.mulf %303, %10 : vector<8x128xf32>
    %305 = arith.addf %304, %13 : vector<8x128xf32>
    %306 = vector.extract_strided_slice %305 {offsets = [0, 0], sizes = [8, 32], strides = [1, 1]} : vector<8x128xf32> to vector<8x32xf32>
    %307 = vector.extract_strided_slice %305 {offsets = [0, 32], sizes = [8, 32], strides = [1, 1]} : vector<8x128xf32> to vector<8x32xf32>
    %308 = vector.extract_strided_slice %305 {offsets = [0, 64], sizes = [8, 32], strides = [1, 1]} : vector<8x128xf32> to vector<8x32xf32>
    %309 = vector.extract_strided_slice %305 {offsets = [0, 96], sizes = [8, 32], strides = [1, 1]} : vector<8x128xf32> to vector<8x32xf32>
    %310 = arith.mulf %307, %294 : vector<8x32xf32>
    %311 = arith.mulf %306, %308 : vector<8x32xf32>
    %312 = arith.addf %310, %311 : vector<8x32xf32>
    %313 = math.tanh %312 : vector<8x32xf32>
    %314 = arith.mulf %309, %313 : vector<8x32xf32>
    %c56_99 = arith.constant 56 : index
    %c0_100 = arith.constant 0 : index
    %315 = vector.load %arg13[%c56_99, %c0_100] : memref<64x32xf32, #tpu.memory_space<vmem>>, vector<8x32xf32>
    tpu.vector_store %arg13[%c56_99, %c0_100], %314 {strides = array<i32>} : memref<64x32xf32, #tpu.memory_space<vmem>>, vector<8x32xf32>,
    %cst_101 = arith.constant 0.000000e+00 : f32
    %316 = vector.broadcast %cst_101 : f32 to vector<8x32xf32>
    %c1_i32 = arith.constant 1 : i32
    %317 = vector.broadcast %c1_i32 : i32 to vector<8x1xi32>
    %318 = arith.cmpi eq, %1, %317 : vector<8x1xi32>
    %c0_102 = arith.constant 0 : index
    %c0_103 = arith.constant 0 : index
    %319 = vector.load %arg13[%c0_102, %c0_103] : memref<64x32xf32, #tpu.memory_space<vmem>>, vector<8x32xf32>
    %320 = vector.shape_cast %318 : vector<8x1xi1> to vector<8x1xi1>
    %321 = vector.broadcast %320 : vector<8x1xi1> to vector<8x32xi1>
    %322 = arith.select %321, %319, %316 : vector<8x32xi1>, vector<8x32xf32>
    %c2_i32 = arith.constant 2 : i32
    %323 = vector.broadcast %c2_i32 : i32 to vector<8x1xi32>
    %324 = arith.cmpi eq, %1, %323 : vector<8x1xi32>
    %c8_104 = arith.constant 8 : index
    %c0_105 = arith.constant 0 : index
    %325 = vector.load %arg13[%c8_104, %c0_105] : memref<64x32xf32, #tpu.memory_space<vmem>>, vector<8x32xf32>
    %326 = vector.shape_cast %324 : vector<8x1xi1> to vector<8x1xi1>
    %327 = vector.broadcast %326 : vector<8x1xi1> to vector<8x32xi1>
    %328 = arith.select %327, %325, %322 : vector<8x32xi1>, vector<8x32xf32>
    %c3_i32 = arith.constant 3 : i32
    %329 = vector.broadcast %c3_i32 : i32 to vector<8x1xi32>
    %330 = arith.cmpi eq, %1, %329 : vector<8x1xi32>
    %c16_106 = arith.constant 16 : index
    %c0_107 = arith.constant 0 : index
    %331 = vector.load %arg13[%c16_106, %c0_107] : memref<64x32xf32, #tpu.memory_space<vmem>>, vector<8x32xf32>
    %332 = vector.shape_cast %330 : vector<8x1xi1> to vector<8x1xi1>
    %333 = vector.broadcast %332 : vector<8x1xi1> to vector<8x32xi1>
    %334 = arith.select %333, %331, %328 : vector<8x32xi1>, vector<8x32xf32>
    %c4_i32 = arith.constant 4 : i32
    %335 = vector.broadcast %c4_i32 : i32 to vector<8x1xi32>
    %336 = arith.cmpi eq, %1, %335 : vector<8x1xi32>
    %c24_108 = arith.constant 24 : index
    %c0_109 = arith.constant 0 : index
    %337 = vector.load %arg13[%c24_108, %c0_109] : memref<64x32xf32, #tpu.memory_space<vmem>>, vector<8x32xf32>
    %338 = vector.shape_cast %336 : vector<8x1xi1> to vector<8x1xi1>
    %339 = vector.broadcast %338 : vector<8x1xi1> to vector<8x32xi1>
    %340 = arith.select %339, %337, %334 : vector<8x32xi1>, vector<8x32xf32>
    %c5_i32 = arith.constant 5 : i32
    %341 = vector.broadcast %c5_i32 : i32 to vector<8x1xi32>
    %342 = arith.cmpi eq, %1, %341 : vector<8x1xi32>
    %c32_110 = arith.constant 32 : index
    %c0_111 = arith.constant 0 : index
    %343 = vector.load %arg13[%c32_110, %c0_111] : memref<64x32xf32, #tpu.memory_space<vmem>>, vector<8x32xf32>
    %344 = vector.shape_cast %342 : vector<8x1xi1> to vector<8x1xi1>
    %345 = vector.broadcast %344 : vector<8x1xi1> to vector<8x32xi1>
    %346 = arith.select %345, %343, %340 : vector<8x32xi1>, vector<8x32xf32>
    %c6_i32 = arith.constant 6 : i32
    %347 = vector.broadcast %c6_i32 : i32 to vector<8x1xi32>
    %348 = arith.cmpi eq, %1, %347 : vector<8x1xi32>
    %c40_112 = arith.constant 40 : index
    %c0_113 = arith.constant 0 : index
    %349 = vector.load %arg13[%c40_112, %c0_113] : memref<64x32xf32, #tpu.memory_space<vmem>>, vector<8x32xf32>
    %350 = vector.shape_cast %348 : vector<8x1xi1> to vector<8x1xi1>
    %351 = vector.broadcast %350 : vector<8x1xi1> to vector<8x32xi1>
    %352 = arith.select %351, %349, %346 : vector<8x32xi1>, vector<8x32xf32>
    %c7_i32 = arith.constant 7 : i32
    %353 = vector.broadcast %c7_i32 : i32 to vector<8x1xi32>
    %354 = arith.cmpi eq, %1, %353 : vector<8x1xi32>
    %c48_114 = arith.constant 48 : index
    %c0_115 = arith.constant 0 : index
    %355 = vector.load %arg13[%c48_114, %c0_115] : memref<64x32xf32, #tpu.memory_space<vmem>>, vector<8x32xf32>
    %356 = vector.shape_cast %354 : vector<8x1xi1> to vector<8x1xi1>
    %357 = vector.broadcast %356 : vector<8x1xi1> to vector<8x32xi1>
    %358 = arith.select %357, %355, %352 : vector<8x32xi1>, vector<8x32xf32>
    %c8_i32 = arith.constant 8 : i32
    %359 = vector.broadcast %c8_i32 : i32 to vector<8x1xi32>
    %360 = arith.cmpi eq, %1, %359 : vector<8x1xi32>
    %c56_116 = arith.constant 56 : index
    %c0_117 = arith.constant 0 : index
    %361 = vector.load %arg13[%c56_116, %c0_117] : memref<64x32xf32, #tpu.memory_space<vmem>>, vector<8x32xf32>
    %362 = vector.shape_cast %360 : vector<8x1xi1> to vector<8x1xi1>
    %363 = vector.broadcast %362 : vector<8x1xi1> to vector<8x32xi1>
    %364 = arith.select %363, %361, %358 : vector<8x32xi1>, vector<8x32xf32>
    %365 = arith.truncf %364 : vector<8x32xf32> to vector<8x32xbf16>
    %c0_118 = arith.constant 0 : index
    %c0_119 = arith.constant 0 : index
    %366 = vector.load %arg9[%c0_118, %c0_119] : memref<32x8xbf16, #tpu.memory_space<vmem>>, vector<32x8xbf16>
    %cst_120 = arith.constant dense<0.000000e+00> : vector<8x8xf32>
    %367 = tpu.matmul %365, %366, %cst_120 {dimension_numbers = #tpu.dot_dimension_numbers<[1], [0], [0], [1], [0, 0, 1, 1], [], []>} : vector<8x32xbf16>, vector<32x8xbf16>, vector<8x8xf32> -> vector<8x8xf32>
    %c0_121 = arith.constant 0 : index
    %c0_122 = arith.constant 0 : index
    %368 = vector.load %arg10[%c0_121, %c0_122] : memref<1x8xf32, #tpu.memory_space<vmem>>, vector<1x8xf32>
    %369 = vector.broadcast %368 : vector<1x8xf32> to vector<8x8xf32>
    %370 = arith.addf %367, %369 : vector<8x8xf32>
    %c0_123 = arith.constant 0 : index
    %c0_124 = arith.constant 0 : index
    %371 = vector.load %arg11[%c0_123, %c0_124] : memref<8x8xf32, #tpu.memory_space<vmem>>, vector<8x8xf32>
    tpu.vector_store %arg11[%c0_123, %c0_124], %370 {strides = array<i32>} : memref<8x8xf32, #tpu.memory_space<vmem>>, vector<8x8xf32>,
    return
  }
  func.func @transform_0(%arg0: i32) -> (i32, i32, i32) {
    %c0_i32 = arith.constant 0 : i32
    %c0_i32_0 = arith.constant 0 : i32
    %c0_i32_1 = arith.constant 0 : i32
    return %arg0, %c0_i32, %c0_i32_0 : i32, i32, i32
  }
  func.func @transform_1(%arg0: i32) -> (i32, i32, i32) {
    %c0_i32 = arith.constant 0 : i32
    %c0_i32_0 = arith.constant 0 : i32
    %c0_i32_1 = arith.constant 0 : i32
    return %arg0, %c0_i32, %c0_i32_0 : i32, i32, i32
  }
  func.func @transform_2(%arg0: i32) -> (i32, i32) {
    %c0_i32 = arith.constant 0 : i32
    %c0_i32_0 = arith.constant 0 : i32
    %c0_i32_1 = arith.constant 0 : i32
    return %c0_i32, %c0_i32_0 : i32, i32
  }
  func.func @transform_3(%arg0: i32) -> (i32, i32) {
    %c0_i32 = arith.constant 0 : i32
    %c0_i32_0 = arith.constant 0 : i32
    %c0_i32_1 = arith.constant 0 : i32
    return %c0_i32, %c0_i32_0 : i32, i32
  }
  func.func @transform_4(%arg0: i32) -> (i32, i32) {
    %c0_i32 = arith.constant 0 : i32
    %c0_i32_0 = arith.constant 0 : i32
    %c0_i32_1 = arith.constant 0 : i32
    return %c0_i32, %c0_i32_0 : i32, i32
  }
  func.func @transform_5(%arg0: i32) -> (i32, i32) {
    %c0_i32 = arith.constant 0 : i32
    %c0_i32_0 = arith.constant 0 : i32
    %c0_i32_1 = arith.constant 0 : i32
    return %c0_i32, %c0_i32_0 : i32, i32
  }
  func.func @transform_6(%arg0: i32) -> (i32, i32) {
    %c0_i32 = arith.constant 0 : i32
    %c0_i32_0 = arith.constant 0 : i32
    %c0_i32_1 = arith.constant 0 : i32
    return %c0_i32, %c0_i32_0 : i32, i32
  }
  func.func @transform_7(%arg0: i32) -> (i32, i32) {
    %c0_i32 = arith.constant 0 : i32
    %c0_i32_0 = arith.constant 0 : i32
    %c0_i32_1 = arith.constant 0 : i32
    return %c0_i32, %c0_i32_0 : i32, i32
  }
  func.func @transform_8(%arg0: i32) -> (i32, i32) {
    %c0_i32 = arith.constant 0 : i32
    %c0_i32_0 = arith.constant 0 : i32
    %c0_i32_1 = arith.constant 0 : i32
    return %c0_i32, %c0_i32_0 : i32, i32
  }
  func.func @transform_9(%arg0: i32) -> (i32, i32) {
    %c0_i32 = arith.constant 0 : i32
    %c0_i32_0 = arith.constant 0 : i32
    %c0_i32_1 = arith.constant 0 : i32
    return %c0_i32, %c0_i32_0 : i32, i32
  }
  func.func @transform_10(%arg0: i32) -> (i32, i32) {
    %c0_i32 = arith.constant 0 : i32
    %c0_i32_0 = arith.constant 0 : i32
    return %arg0, %c0_i32 : i32, i32
  }
}

</mosaic_0001>

<llo_original>
// kernel: basic_lstm_forward.1
$region0: #{basic_lstm_forward.1}
  #allocation0 [shape = 'u32[]', space=smem, size = 0x4, offset = 0x4, fixed_abs, tag = 'smem constant byte address 0x4 - core index']
  #allocation1 [shape = 'u32[144,128]{1,0:T(1,128)}', space=vmem, size = 0x12000, scoped, tag = 'internal scratch']
  #allocation2 [shape = 'f32[64,128]{1,0:T(8,128)}', space=vmem, size = 0x8000, scoped, tag = 'scratch operand']
  #allocation3 [shape = 'f32[64,32]{1,0:T(8,128)}', space=vmem, size = 0x8000, scoped, tag = 'scratch operand']
  %s0 = inlined_call_operand.vmem [shape: bf16[2,64,16], index: 0, kind: input, shape index: {}]
  %s1 = inlined_call_operand.vmem [shape: s32[2,8,1], index: 1, kind: input, shape index: {}]
  %s2 = inlined_call_operand.vmem [shape: bf16[16,128], index: 2, kind: input, shape index: {}]
  %s3 = inlined_call_operand.vmem [shape: bf16[32,128], index: 3, kind: input, shape index: {}]
  %s4 = inlined_call_operand.vmem [shape: f32[1,128], index: 4, kind: input, shape index: {}]
  %s5 = inlined_call_operand.vmem [shape: bf16[32,128], index: 5, kind: input, shape index: {}]
  %s6 = inlined_call_operand.vmem [shape: bf16[32,128], index: 6, kind: input, shape index: {}]
  %s7 = inlined_call_operand.vmem [shape: f32[1,128], index: 7, kind: input, shape index: {}]
  %s8 = inlined_call_operand.vmem [shape: bf16[32,8], index: 8, kind: input, shape index: {}]
  %s9 = inlined_call_operand.vmem [shape: f32[1,8], index: 9, kind: input, shape index: {}]
  %s10 = inlined_call_operand.vmem [shape: f32[16,8], index: 10, kind: output, shape index: {}]
  %s11 = sld [smem:[#allocation0]]
  $region73: #{basic_lstm_forward.1} parent=0
    _
  %s13 = ssub.s32 1, %s11
  %s14 = scalar_select 0, %s13, %s11
  loop: start=0, step=1, limit=4
  $region2: #{basic_lstm_forward.1} parent=0 // loop_pre_header
    _
  $region3: #{basic_lstm_forward.1} parent=0 // loop_header
    %s16 = sphi 0, %s20
    %p17 = scmp.ge.s32.totalorder %s16, 4
    %s26 = sphi 0, %s28
    %s29 = sphi 0, %s26
    %s30 = sphi 0, %s29
    %s46 = sphi 0, %s30
    %s52 = sphi 0, %s54
    %s55 = sphi 0, %s52
    %s56 = sphi 0, %s55
    %s72 = sphi 0, %s56
    %s76 = sphi 0, %s76
    %s78 = sphi 0, %s76
    %s79 = sphi 0, %s78
    %s93 = sphi 0, %s79
    %s97 = sphi 0, %s97
    %s99 = sphi 0, %s97
    %s100 = sphi 0, %s99
    %s114 = sphi 0, %s100
    %s118 = sphi 0, %s118
    %s120 = sphi 0, %s118
    %s121 = sphi 0, %s120
    %s135 = sphi 0, %s121
    %s139 = sphi 0, %s139
    %s141 = sphi 0, %s139
    %s142 = sphi 0, %s141
    %s156 = sphi 0, %s142
    %s160 = sphi 0, %s160
    %s162 = sphi 0, %s160
    %s163 = sphi 0, %s162
    %s177 = sphi 0, %s163
    %s181 = sphi 0, %s181
    %s183 = sphi 0, %s181
    %s184 = sphi 0, %s183
    %s198 = sphi 0, %s184
    %s202 = sphi 0, %s202
    %s204 = sphi 0, %s202
    %s205 = sphi 0, %s204
    %s219 = sphi 0, %s205
    %s223 = sphi 0, %s223
    %s225 = sphi 0, %s223
    %s226 = sphi 0, %s225
    %s240 = sphi 0, %s226
    %s246 = sphi 0, %s248
    %s249 = sphi 0, %s246
    %s250 = sphi 0, %s249
    %s266 = sphi 0, %s250
  $region4: #{basic_lstm_forward.1} parent=0 // loop_header_branch
    %19 = sbr.rel (%p17) target = $region8
  $region5: #{basic_lstm_forward.1} parent=0 // loop_body
    %s21 = ssub.s32 %s16, 1
    %s22 = ssub.s32 %s16, 2
    %s23 = sadd.s32 %s16, 1
    %s24 = ssub.s32 %s16, %s23
    %p25 = scmp.eq.s32.totalorder %s24, 0
    %s27 = sadd.s32 %s26, 1
    %s28 = scalar_select %p25, %s26, %s27
    %p31 = pneg %p25
    %p32 = scmp.eq.s32.totalorder %s16, 1
    %p33 = por %p31, %p32
    %p34 = scmp.ne.s32.totalorder %s26, %s29
    %p35 = scmp.eq.s32.totalorder %s16, 0
    %p36 = por %p34, %p35
    %p37 = scmp.ne.s32.totalorder %s26, %s29
    %p38 = scmp.eq.s32.totalorder %s21, 1
    %p39 = por %p37, %p38
    %p40 = scmp.ne.s32.totalorder %s29, %s30
    %p41 = scmp.eq.s32.totalorder %s21, 0
    %p42 = por %p40, %p41
    %p43 = scmp.ne.s32.totalorder %s29, %s30
    %p44 = scmp.eq.s32.totalorder %s22, 1
    %p45 = por %p43, %p44
    %p47 = scmp.ne.s32.totalorder %s30, %s46
    %p48 = scmp.eq.s32.totalorder %s22, 0
    %p49 = por %p47, %p48
    %s50 = ssub.s32 %s16, %s23
    %p51 = scmp.eq.s32.totalorder %s50, 0
    %s53 = sadd.s32 %s52, 1
    %s54 = scalar_select %p51, %s52, %s53
    %p57 = pneg %p51
    %p58 = scmp.eq.s32.totalorder %s16, 1
    %p59 = por %p57, %p58
    %p60 = scmp.ne.s32.totalorder %s52, %s55
    %p61 = scmp.eq.s32.totalorder %s16, 0
    %p62 = por %p60, %p61
    %p63 = scmp.ne.s32.totalorder %s52, %s55
    %p64 = scmp.eq.s32.totalorder %s21, 1
    %p65 = por %p63, %p64
    %p66 = scmp.ne.s32.totalorder %s55, %s56
    %p67 = scmp.eq.s32.totalorder %s21, 0
    %p68 = por %p66, %p67
    %p69 = scmp.ne.s32.totalorder %s55, %s56
    %p70 = scmp.eq.s32.totalorder %s22, 1
    %p71 = por %p69, %p70
    %p73 = scmp.ne.s32.totalorder %s56, %s72
    %p74 = scmp.eq.s32.totalorder %s22, 0
    %p75 = por %p73, %p74
    %s77 = sadd.s32 %s76, 1
    %p80 = scmp.eq.s32.totalorder %s16, 1
    %p81 = scmp.ne.s32.totalorder %s76, %s78
    %p82 = scmp.eq.s32.totalorder %s16, 0
    %p83 = por %p81, %p82
    %p84 = scmp.ne.s32.totalorder %s76, %s78
    %p85 = scmp.eq.s32.totalorder %s21, 1
    %p86 = por %p84, %p85
    %p87 = scmp.ne.s32.totalorder %s78, %s79
    %p88 = scmp.eq.s32.totalorder %s21, 0
    %p89 = por %p87, %p88
    %p90 = scmp.ne.s32.totalorder %s78, %s79
    %p91 = scmp.eq.s32.totalorder %s22, 1
    %p92 = por %p90, %p91
    %p94 = scmp.ne.s32.totalorder %s79, %s93
    %p95 = scmp.eq.s32.totalorder %s22, 0
    %p96 = por %p94, %p95
    %s98 = sadd.s32 %s97, 1
    %p101 = scmp.eq.s32.totalorder %s16, 1
    %p102 = scmp.ne.s32.totalorder %s97, %s99
    %p103 = scmp.eq.s32.totalorder %s16, 0
    %p104 = por %p102, %p103
    %p105 = scmp.ne.s32.totalorder %s97, %s99
    %p106 = scmp.eq.s32.totalorder %s21, 1
    %p107 = por %p105, %p106
    %p108 = scmp.ne.s32.totalorder %s99, %s100
    %p109 = scmp.eq.s32.totalorder %s21, 0
    %p110 = por %p108, %p109
    %p111 = scmp.ne.s32.totalorder %s99, %s100
    %p112 = scmp.eq.s32.totalorder %s22, 1
    %p113 = por %p111, %p112
    %p115 = scmp.ne.s32.totalorder %s100, %s114
    %p116 = scmp.eq.s32.totalorder %s22, 0
    %p117 = por %p115, %p116
    %s119 = sadd.s32 %s118, 1
    %p122 = scmp.eq.s32.totalorder %s16, 1
    %p123 = scmp.ne.s32.totalorder %s118, %s120
    %p124 = scmp.eq.s32.totalorder %s16, 0
    %p125 = por %p123, %p124
    %p126 = scmp.ne.s32.totalorder %s118, %s120
    %p127 = scmp.eq.s32.totalorder %s21, 1
    %p128 = por %p126, %p127
    %p129 = scmp.ne.s32.totalorder %s120, %s121
    %p130 = scmp.eq.s32.totalorder %s21, 0
    %p131 = por %p129, %p130
    %p132 = scmp.ne.s32.totalorder %s120, %s121
    %p133 = scmp.eq.s32.totalorder %s22, 1
    %p134 = por %p132, %p133
    %p136 = scmp.ne.s32.totalorder %s121, %s135
    %p137 = scmp.eq.s32.totalorder %s22, 0
    %p138 = por %p136, %p137
    %s140 = sadd.s32 %s139, 1
    %p143 = scmp.eq.s32.totalorder %s16, 1
    %p144 = scmp.ne.s32.totalorder %s139, %s141
    %p145 = scmp.eq.s32.totalorder %s16, 0
    %p146 = por %p144, %p145
    %p147 = scmp.ne.s32.totalorder %s139, %s141
    %p148 = scmp.eq.s32.totalorder %s21, 1
    %p149 = por %p147, %p148
    %p150 = scmp.ne.s32.totalorder %s141, %s142
    %p151 = scmp.eq.s32.totalorder %s21, 0
    %p152 = por %p150, %p151
    %p153 = scmp.ne.s32.totalorder %s141, %s142
    %p154 = scmp.eq.s32.totalorder %s22, 1
    %p155 = por %p153, %p154
    %p157 = scmp.ne.s32.totalorder %s142, %s156
    %p158 = scmp.eq.s32.totalorder %s22, 0
    %p159 = por %p157, %p158
    %s161 = sadd.s32 %s160, 1
    %p164 = scmp.eq.s32.totalorder %s16, 1
    %p165 = scmp.ne.s32.totalorder %s160, %s162
    %p166 = scmp.eq.s32.totalorder %s16, 0
    %p167 = por %p165, %p166
    %p168 = scmp.ne.s32.totalorder %s160, %s162
    %p169 = scmp.eq.s32.totalorder %s21, 1
    %p170 = por %p168, %p169
    %p171 = scmp.ne.s32.totalorder %s162, %s163
    %p172 = scmp.eq.s32.totalorder %s21, 0
    %p173 = por %p171, %p172
    %p174 = scmp.ne.s32.totalorder %s162, %s163
    %p175 = scmp.eq.s32.totalorder %s22, 1
    %p176 = por %p174, %p175
    %p178 = scmp.ne.s32.totalorder %s163, %s177
    %p179 = scmp.eq.s32.totalorder %s22, 0
    %p180 = por %p178, %p179
    %s182 = sadd.s32 %s181, 1
    %p185 = scmp.eq.s32.totalorder %s16, 1
    %p186 = scmp.ne.s32.totalorder %s181, %s183
    %p187 = scmp.eq.s32.totalorder %s16, 0
    %p188 = por %p186, %p187
    %p189 = scmp.ne.s32.totalorder %s181, %s183
    %p190 = scmp.eq.s32.totalorder %s21, 1
    %p191 = por %p189, %p190
    %p192 = scmp.ne.s32.totalorder %s183, %s184
    %p193 = scmp.eq.s32.totalorder %s21, 0
    %p194 = por %p192, %p193
    %p195 = scmp.ne.s32.totalorder %s183, %s184
    %p196 = scmp.eq.s32.totalorder %s22, 1
    %p197 = por %p195, %p196
    %p199 = scmp.ne.s32.totalorder %s184, %s198
    %p200 = scmp.eq.s32.totalorder %s22, 0
    %p201 = por %p199, %p200
    %s203 = sadd.s32 %s202, 1
    %p206 = scmp.eq.s32.totalorder %s16, 1
    %p207 = scmp.ne.s32.totalorder %s202, %s204
    %p208 = scmp.eq.s32.totalorder %s16, 0
    %p209 = por %p207, %p208
    %p210 = scmp.ne.s32.totalorder %s202, %s204
    %p211 = scmp.eq.s32.totalorder %s21, 1
    %p212 = por %p210, %p211
    %p213 = scmp.ne.s32.totalorder %s204, %s205
    %p214 = scmp.eq.s32.totalorder %s21, 0
    %p215 = por %p213, %p214
    %p216 = scmp.ne.s32.totalorder %s204, %s205
    %p217 = scmp.eq.s32.totalorder %s22, 1
    %p218 = por %p216, %p217
    %p220 = scmp.ne.s32.totalorder %s205, %s219
    %p221 = scmp.eq.s32.totalorder %s22, 0
    %p222 = por %p220, %p221
    %s224 = sadd.s32 %s223, 1
    %p227 = scmp.eq.s32.totalorder %s16, 1
    %p228 = scmp.ne.s32.totalorder %s223, %s225
    %p229 = scmp.eq.s32.totalorder %s16, 0
    %p230 = por %p228, %p229
    %p231 = scmp.ne.s32.totalorder %s223, %s225
    %p232 = scmp.eq.s32.totalorder %s21, 1
    %p233 = por %p231, %p232
    %p234 = scmp.ne.s32.totalorder %s225, %s226
    %p235 = scmp.eq.s32.totalorder %s21, 0
    %p236 = por %p234, %p235
    %p237 = scmp.ne.s32.totalorder %s225, %s226
    %p238 = scmp.eq.s32.totalorder %s22, 1
    %p239 = por %p237, %p238
    %p241 = scmp.ne.s32.totalorder %s226, %s240
    %p242 = scmp.eq.s32.totalorder %s22, 0
    %p243 = por %p241, %p242
    %s244 = ssub.s32 %s16, %s23
    %p245 = scmp.eq.s32.totalorder %s244, 0
    %s247 = sadd.s32 %s246, 1
    %s248 = scalar_select %p245, %s246, %s247
    %p251 = pneg %p245
    %p252 = scmp.eq.s32.totalorder %s16, 1
    %p253 = por %p251, %p252
    %p254 = scmp.ne.s32.totalorder %s246, %s249
    %p255 = scmp.eq.s32.totalorder %s16, 0
    %p256 = por %p254, %p255
    %p257 = scmp.ne.s32.totalorder %s246, %s249
    %p258 = scmp.eq.s32.totalorder %s21, 1
    %p259 = por %p257, %p258
    %p260 = scmp.ne.s32.totalorder %s249, %s250
    %p261 = scmp.eq.s32.totalorder %s21, 0
    %p262 = por %p260, %p261
    %p263 = scmp.ne.s32.totalorder %s249, %s250
    %p264 = scmp.eq.s32.totalorder %s22, 1
    %p265 = por %p263, %p264
    %p267 = scmp.ne.s32.totalorder %s250, %s266
    %p268 = scmp.eq.s32.totalorder %s22, 0
    %p269 = por %p267, %p268
    %p270 = scmp.le.s32.totalorder 1, %s16
    %p271 = scmp.lt.s32.totalorder %s16, 3
    %p272 = pnand %p270, %p271
    %p273 = pneg %p272
    // Predicated region
    $region9: #{basic_lstm_forward.1} parent=5 // pred_check
      _
    $region10: #{basic_lstm_forward.1} parent=5 // pred_check_branch
      %275 = sbr.rel (%p272) target = $region12
    $region11: #{basic_lstm_forward.1} parent=5 // pred_region
      %s276 = ssub.s32 %s16, 1
      // Predicated region
      $region13: #{basic_lstm_forward.1} parent=11 // pred_check
        %p277 = pneg %p89
      $region14: #{basic_lstm_forward.1} parent=11 // pred_check_branch
        %279 = sbr.rel (%p277) target = $region16
      $region15: #{basic_lstm_forward.1} parent=11 // pred_region
        _
      $region16: #{basic_lstm_forward.1} parent=11 // pred_fallthru
        _
      // Predicated region
      $region17: #{basic_lstm_forward.1} parent=11 // pred_check
        %p280 = pneg %p110
      $region18: #{basic_lstm_forward.1} parent=11 // pred_check_branch
        %282 = sbr.rel (%p280) target = $region20
      $region19: #{basic_lstm_forward.1} parent=11 // pred_region
        _
      $region20: #{basic_lstm_forward.1} parent=11 // pred_fallthru
        _
      // Predicated region
      $region21: #{basic_lstm_forward.1} parent=11 // pred_check
        %p283 = pneg %p131
      $region22: #{basic_lstm_forward.1} parent=11 // pred_check_branch
        %285 = sbr.rel (%p283) target = $region24
      $region23: #{basic_lstm_forward.1} parent=11 // pred_region
        _
      $region24: #{basic_lstm_forward.1} parent=11 // pred_fallthru
        _
      // Predicated region
      $region25: #{basic_lstm_forward.1} parent=11 // pred_check
        %p286 = pneg %p152
      $region26: #{basic_lstm_forward.1} parent=11 // pred_check_branch
        %288 = sbr.rel (%p286) target = $region28
      $region27: #{basic_lstm_forward.1} parent=11 // pred_region
        _
      $region28: #{basic_lstm_forward.1} parent=11 // pred_fallthru
        _
      // Predicated region
      $region29: #{basic_lstm_forward.1} parent=11 // pred_check
        %p289 = pneg %p173
      $region30: #{basic_lstm_forward.1} parent=11 // pred_check_branch
        %291 = sbr.rel (%p289) target = $region32
      $region31: #{basic_lstm_forward.1} parent=11 // pred_region
        _
      $region32: #{basic_lstm_forward.1} parent=11 // pred_fallthru
        _
      // Predicated region
      $region33: #{basic_lstm_forward.1} parent=11 // pred_check
        %p292 = pneg %p194
      $region34: #{basic_lstm_forward.1} parent=11 // pred_check_branch
        %294 = sbr.rel (%p292) target = $region36
      $region35: #{basic_lstm_forward.1} parent=11 // pred_region
        _
      $region36: #{basic_lstm_forward.1} parent=11 // pred_fallthru
        _
      // Predicated region
      $region37: #{basic_lstm_forward.1} parent=11 // pred_check
        %p295 = pneg %p215
      $region38: #{basic_lstm_forward.1} parent=11 // pred_check_branch
        %297 = sbr.rel (%p295) target = $region40
      $region39: #{basic_lstm_forward.1} parent=11 // pred_region
        _
      $region40: #{basic_lstm_forward.1} parent=11 // pred_fallthru
        _
      // Predicated region
      $region41: #{basic_lstm_forward.1} parent=11 // pred_check
        %p298 = pneg %p236
      $region42: #{basic_lstm_forward.1} parent=11 // pred_check_branch
        %300 = sbr.rel (%p298) target = $region44
      $region43: #{basic_lstm_forward.1} parent=11 // pred_region
        _
      $region44: #{basic_lstm_forward.1} parent=11 // pred_fallthru
        _
    $region12: #{basic_lstm_forward.1} parent=5 // pred_fallthru
      _
    %p301 = scmp.lt.s32.totalorder %s16, 2
    // Predicated region
    $region45: #{basic_lstm_forward.1} parent=5 // pred_check
      %p302 = pneg %p301
    $region46: #{basic_lstm_forward.1} parent=5 // pred_check_branch
      %304 = sbr.rel (%p302) target = $region48
    $region47: #{basic_lstm_forward.1} parent=5 // pred_region
      // Predicated region
      $region49: #{basic_lstm_forward.1} parent=47 // pred_check
        %p305 = pneg %p36
      $region50: #{basic_lstm_forward.1} parent=47 // pred_check_branch
        %307 = sbr.rel (%p305) target = $region52
      $region51: #{basic_lstm_forward.1} parent=47 // pred_region
        %p308 = scmp.lt.s32.totalorder %s16, 1
        %s309 = scalar_select %p308, %s16, 1
        %s310 = smul.addr %s309, 8
        %s311 = smul.addr %s310, 4
        %s312 = scalar_lea.vmem %s0, %s311
      $region52: #{basic_lstm_forward.1} parent=47 // pred_fallthru
        _
      // Predicated region
      $region53: #{basic_lstm_forward.1} parent=47 // pred_check
        %p313 = pneg %p62
      $region54: #{basic_lstm_forward.1} parent=47 // pred_check_branch
        %315 = sbr.rel (%p313) target = $region56
      $region55: #{basic_lstm_forward.1} parent=47 // pred_region
        %p316 = scmp.lt.s32.totalorder %s16, 1
        %s317 = scalar_select %p316, %s16, 1
        %s318 = smul.addr %s317, 8
        %s319 = scalar_lea.vmem %s1, %s318
      $region56: #{basic_lstm_forward.1} parent=47 // pred_fallthru
        _
    $region48: #{basic_lstm_forward.1} parent=5 // pred_fallthru
      _
    %p320 = scmp.le.s32.totalorder 1, %s16
    %p321 = scmp.lt.s32.totalorder %s16, 3
    %p322 = pnand %p320, %p321
    %p323 = pneg %p322
    // Predicated region
    $region57: #{basic_lstm_forward.1} parent=5 // pred_check
      _
    $region58: #{basic_lstm_forward.1} parent=5 // pred_check_branch
      %325 = sbr.rel (%p322) target = $region60
    $region59: #{basic_lstm_forward.1} parent=5 // pred_region
      %s326 = ssub.s32 %s16, 1
      %p327 = scmp.lt.s32.totalorder %s21, 1
      %s328 = scalar_select %p327, %s21, 1
      %s329 = smul.addr %s328, 8
      %s330 = smul.addr %s329, 4
      %s331 = scalar_lea.vmem %s0, %s330
      %p332 = pneg %p42
      %p333 = pneg %p39
      %p334 = scmp.lt.s32.totalorder %s21, 1
      %s335 = scalar_select %p334, %s21, 1
      %s336 = smul.addr %s335, 8
      %s337 = scalar_lea.vmem %s1, %s336
      %p338 = pneg %p68
      %p339 = pneg %p65
      %p340 = pneg %p89
      %p341 = pneg %p86
      %p342 = pneg %p110
      %p343 = pneg %p107
      %p344 = pneg %p131
      %p345 = pneg %p128
      %p346 = pneg %p152
      %p347 = pneg %p149
      %p348 = pneg %p173
      %p349 = pneg %p170
      %p350 = pneg %p194
      %p351 = pneg %p191
      %p352 = pneg %p215
      %p353 = pneg %p212
      %p354 = pneg %p236
      %p355 = pneg %p233
      %p356 = pneg %p262
      %p357 = pneg %p259
      %p358 = scmp.lt.s32.totalorder %s21, 1
      %s359 = scalar_select %p358, %s21, 1
      %s360 = smul.addr %s359, 8
      %s361 = scalar_lea.vmem %s10, %s360
      %p362 = scmp.lt.s32.totalorder %s21, 1
      %s363 = scalar_select %p362, %s21, 1
      %s364 = smul.addr %s363, 8
      %s365 = smul.addr %s364, 4
      %s366 = scalar_lea.vmem %s0, %s365
      %p367 = scmp.lt.s32.totalorder %s21, 1
      %s368 = scalar_select %p367, %s21, 1
      %s369 = smul.addr %s368, 8
      %s370 = scalar_lea.vmem %s1, %s369
      %p371 = scmp.lt.s32.totalorder %s21, 1
      %s372 = scalar_select %p371, %s21, 1
      %s373 = smul.addr %s372, 8
      %s374 = scalar_lea.vmem %s10, %s373
      %v376 = vld [vmem:[%s370] sm:$0xff]
      %v377 = vlaneseq
      %v378 = vand.u32 %v377, 127
      %vm379 = vcmp.ge.s32.totalorder %v378, 64
      %vm380 = vcmp.lt.s32.totalorder %v378, 96
      %vm381 = vmand %vm379, %vm380
      %v382 = vsel %vm381, 1.0, 0.5
      %v383 = vsel %vm381, 0.0, 0.5
      %v384 = vld [vmem:[%s366] sm:$0xf]
      %v385 = vld [vmem:[%s366 + $0x4] sm:$0xf]
      %v386 = vld [vmem:[%s366 + $0x8] sm:$0xf]
      %v387 = vld [vmem:[%s366 + $0xc] sm:$0xf]
      %v388 = vld [vmem:[%s366 + $0x10] sm:$0xf]
      %v389 = vld [vmem:[%s366 + $0x14] sm:$0xf]
      %v390 = vld [vmem:[%s366 + $0x18] sm:$0xf]
      %v391 = vld [vmem:[%s366 + $0x1c] sm:$0xf]
      %v392 = vld [vmem:[%s2] sm:$0xf]
      %v393 = vld [vmem:[%s2 + $0x4] sm:$0xf]
      %v394 = vld [vmem:[%s4] sm:$0x1]
      %v396 = vlaneseq
      %v397 = vshrl.u32 %v396, 7
      %v398 = vsub.s32 0, %v397
      %v399 = vrot.slane %v394, %v398
      %v409 = vunpack.c.l.b16 %v384
      %v410 = vunpack.c.l.b16 %v385
      %v411 = vunpack.c.l.b16 %v386
      %v412 = vunpack.c.l.b16 %v387
      %v413 = vunpack.c.l.b16 %v388
      %v414 = vunpack.c.l.b16 %v389
      %v415 = vunpack.c.l.b16 %v390
      %v416 = vunpack.c.l.b16 %v391
      %v417 = vpack.c.b16 %v410, %v409
      %v418 = vpack.c.b16 %v412, %v411
      %v419 = vpack.c.b16 %v414, %v413
      %v420 = vpack.c.b16 %v416, %v415
      %v423 = vunpack.c.l.b16 %v392
      %v424 = vunpack.c.l.b16 %v393
      %v425 = vpack.c.b16 %v424, %v423
      %vm427 = vcmask 130048
      %v429 = vsel %vm427, %v417, 0
      %v432 = vsel %vm427, %v418, 0
      %v435 = vsel %vm427, %v419, 0
      %v438 = vsel %vm427, %v420, 0
      %440 = vmatprep.subr.bf16.mxu0 0
      %441 = vmatpush1.bf16.msra.mxu0 %v425
      %442 = vmatprep.subr.bf16.mxu0 0
      %443 = vmatpush1.bf16.msra.mxu0 0
      %444 = vmatprep.subr.bf16.mxu0 0
      %445 = vmatpush1.bf16.msra.mxu0 0
      %446 = vmatprep.subr.bf16.mxu0 0
      %447 = vmatpush1.bf16.msra.mxu0 0
      %448 = vmatprep.subr.bf16.mxu0 0
      %449 = vmatpush1.bf16.msra.mxu0 0
      %450 = vmatprep.subr.bf16.mxu0 0
      %451 = vmatpush1.bf16.msra.mxu0 0
      %452 = vmatprep.subr.bf16.mxu0 0
      %453 = vmatpush1.bf16.msra.mxu0 0
      %454 = vmatprep.subr.bf16.mxu0 0
      %455 = vmatpush1.bf16.msra.mxu0 0
      %456 = vmatprep.subr.bf16.mxu0 0
      %457 = vmatpush1.bf16.msra.mxu0 0
      %458 = vmatprep.subr.bf16.mxu0 0
      %459 = vmatpush1.bf16.msra.mxu0 0
      %460 = vmatprep.subr.bf16.mxu0 0
      %461 = vmatpush1.bf16.msra.mxu0 0
      %462 = vmatprep.subr.bf16.mxu0 0
      %463 = vmatpush1.bf16.msra.mxu0 0
      %464 = vmatprep.subr.bf16.mxu0 0
      %465 = vmatpush1.bf16.msra.mxu0 0
      %466 = vmatprep.subr.bf16.mxu0 0
      %467 = vmatpush1.bf16.msra.mxu0 0
      %468 = vmatprep.subr.bf16.mxu0 0
      %469 = vmatpush1.bf16.msra.mxu0 0
      %470 = vmatprep.subr.bf16.mxu0 0
      %471 = vmatpush1.bf16.msra.mxu0 0
      %472 = vmatprep.mubr.bf16.mxu0 0
      %473 = vmatmul.mubr.bf16.gmra.mrb[0].mxu0 %v429
      %v474 = vpop.f32.mrb[0].mxu0
      %v475 = vadd.f32 %v399, %v474
      %v476 = vpop.f32.mrb[0].mxu0
      %v477 = vpop.f32.mrb[0].mxu0
      %v478 = vadd.f32 %v399, %v477
      %v479 = vpop.f32.mrb[0].mxu0
      %480 = vmatprep.mubr.bf16.mxu0 0
      %481 = vmatmul.mubr.bf16.gmra.mrb[0].mxu0 %v432
      %v482 = vpop.f32.mrb[0].mxu0
      %v483 = vadd.f32 %v399, %v482
      %v484 = vpop.f32.mrb[0].mxu0
      %v485 = vpop.f32.mrb[0].mxu0
      %v486 = vadd.f32 %v399, %v485
      %v487 = vpop.f32.mrb[0].mxu0
      %488 = vmatprep.mubr.bf16.mxu0 0
      %489 = vmatmul.mubr.bf16.gmra.mrb[0].mxu0 %v435
      %v490 = vpop.f32.mrb[0].mxu0
      %v491 = vadd.f32 %v399, %v490
      %v492 = vpop.f32.mrb[0].mxu0
      %v493 = vpop.f32.mrb[0].mxu0
      %v494 = vadd.f32 %v399, %v493
      %v495 = vpop.f32.mrb[0].mxu0
      %496 = vmatprep.mubr.bf16.mxu0 0
      %497 = vmatmul.mubr.bf16.gmra.mrb[0].mxu0 %v438
      %v498 = vpop.f32.mrb[0].mxu0
      %v499 = vadd.f32 %v399, %v498
      %v500 = vpop.f32.mrb[0].mxu0
      %v501 = vpop.f32.mrb[0].mxu0
      %v502 = vadd.f32 %v399, %v501
      %v503 = vpop.f32.mrb[0].mxu0
      %504 = vdwg.mxu0
      %505 = vst [vmem:[#allocation2] sm:$0xff] %v475
      %506 = vst [vmem:[#allocation2 + $0x8] sm:$0xff] %v478
      %507 = vst [vmem:[#allocation2 + $0x10] sm:$0xff] %v483
      %508 = vst [vmem:[#allocation2 + $0x18] sm:$0xff] %v486
      %509 = vst [vmem:[#allocation2 + $0x20] sm:$0xff] %v491
      %510 = vst [vmem:[#allocation2 + $0x28] sm:$0xff] %v494
      %511 = vst [vmem:[#allocation2 + $0x30] sm:$0xff] %v499
      %512 = vst [vmem:[#allocation2 + $0x38] sm:$0xff] %v502
      %v513 = vld [vmem:[%s3] sm:$0xf]
      %v514 = vld [vmem:[%s3 + $0x4] sm:$0xf]
      %v515 = vld [vmem:[%s3 + $0x8] sm:$0xf]
      %v516 = vld [vmem:[%s3 + $0xc] sm:$0xf]
      %v517 = vld [vmem:[#allocation2] sm:$0xff]
      %v518 = vmul.f32 %v517, %v382
      %v519 = vtanh.pop %v518
      %v520 = vmul.f32 %v519, %v382
      %v521 = vadd.f32 %v520, %v383
      %v522 = vmul.f32 %v521, 0.0
      %524 = vrot.lane.b32.xlu0 %v521, 64
      %v525 = vpop.permute.xlu0 %524
      %v527 = vmul.f32 %v521, %v525
      %529 = vrot.lane.b32.xlu0 %v527, 32
      %v530 = vpop.permute.xlu0 %529
      %v532 = vadd.f32 %v522, %v530
      %v533 = vtanh.pop %v532
      %535 = vrot.lane.b32.xlu0 %v533, 64
      %v536 = vpop.permute.xlu0 %535
      %v538 = vmul.f32 %v521, %v536
      %v539 = vpack.c.bf16 %v538, %v538
      %541 = vrot.lane.b32.xlu0 %v538, 32
      %v542 = vpop.permute.xlu0 %541
      %vm544 = vcmask 261120
      %545 = vst.msk [vmem:[#allocation3] sm:$0xff] %vm544, %v542
      %v546 = vld [vmem:[#allocation2 + $0x8] sm:$0xff]
      %548 = vrot.lane.b32.xlu0 %v539, 32
      %v549 = vpop.permute.xlu0 %548
      %v554 = vunpack.c.l.b16 %v513
      %v555 = vunpack.c.l.b16 %v514
      %v556 = vunpack.c.l.b16 %v515
      %v557 = vunpack.c.l.b16 %v516
      %v558 = vpack.c.b16 %v555, %v554
      %v559 = vpack.c.b16 %v557, %v556
      %v563 = vsel %vm544, %v549, 0
      %565 = vmatprep.subr.bf16.mxu0 0
      %566 = vmatpush1.bf16.msra.mxu0 %v558
      %567 = vmatprep.subr.bf16.mxu0 0
      %568 = vmatpush1.bf16.msra.mxu0 %v559
      %569 = vmatprep.subr.bf16.mxu0 0
      %570 = vmatpush1.bf16.msra.mxu0 0
      %571 = vmatprep.subr.bf16.mxu0 0
      %572 = vmatpush1.bf16.msra.mxu0 0
      %573 = vmatprep.subr.bf16.mxu0 0
      %574 = vmatpush1.bf16.msra.mxu0 0
      %575 = vmatprep.subr.bf16.mxu0 0
      %576 = vmatpush1.bf16.msra.mxu0 0
      %577 = vmatprep.subr.bf16.mxu0 0
      %578 = vmatpush1.bf16.msra.mxu0 0
      %579 = vmatprep.subr.bf16.mxu0 0
      %580 = vmatpush1.bf16.msra.mxu0 0
      %581 = vmatprep.subr.bf16.mxu0 0
      %582 = vmatpush1.bf16.msra.mxu0 0
      %583 = vmatprep.subr.bf16.mxu0 0
      %584 = vmatpush1.bf16.msra.mxu0 0
      %585 = vmatprep.subr.bf16.mxu0 0
      %586 = vmatpush1.bf16.msra.mxu0 0
      %587 = vmatprep.subr.bf16.mxu0 0
      %588 = vmatpush1.bf16.msra.mxu0 0
      %589 = vmatprep.subr.bf16.mxu0 0
      %590 = vmatpush1.bf16.msra.mxu0 0
      %591 = vmatprep.subr.bf16.mxu0 0
      %592 = vmatpush1.bf16.msra.mxu0 0
      %593 = vmatprep.subr.bf16.mxu0 0
      %594 = vmatpush1.bf16.msra.mxu0 0
      %595 = vmatprep.subr.bf16.mxu0 0
      %596 = vmatpush1.bf16.msra.mxu0 0
      %597 = vmatprep.mubr.bf16.mxu0 0
      %598 = vmatmul.mubr.bf16.gmra.mrb[0].mxu0 %v563
      %v599 = vpop.f32.mrb[0].mxu0
      %v600 = vadd.f32 0.0, %v599
      %v601 = vpop.f32.mrb[0].mxu0
      %v602 = vpop.f32.mrb[0].mxu0
      %v603 = vpop.f32.mrb[0].mxu0
      %604 = vdwg.mxu0
      %v605 = vadd.f32 %v546, %v600
      %v606 = vmul.f32 %v605, %v382
      %v607 = vtanh.pop %v606
      %v608 = vmul.f32 %v607, %v382
      %v609 = vadd.f32 %v608, %v383
      %v610 = vmul.f32 %v609, %v532
      %612 = vrot.lane.b32.xlu0 %v609, 64
      %v613 = vpop.permute.xlu0 %612
      %v615 = vmul.f32 %v609, %v613
      %617 = vrot.lane.b32.xlu0 %v615, 32
      %v618 = vpop.permute.xlu0 %617
      %v620 = vadd.f32 %v610, %v618
      %v621 = vtanh.pop %v620
      %623 = vrot.lane.b32.xlu0 %v621, 64
      %v624 = vpop.permute.xlu0 %623
      %v626 = vmul.f32 %v609, %v624
      %v627 = vpack.c.bf16 %v626, %v626
      %629 = vrot.lane.b32.xlu0 %v626, 32
      %v630 = vpop.permute.xlu0 %629
      %632 = vst.msk [vmem:[#allocation3 + $0x8] sm:$0xff] %vm544, %v630
      %v633 = vld [vmem:[#allocation2 + $0x10] sm:$0xff]
      %635 = vrot.lane.b32.xlu0 %v627, 32
      %v636 = vpop.permute.xlu0 %635
      %v638 = vsel %vm544, %v636, 0
      %640 = vmatprep.subr.bf16.mxu0 0
      %641 = vmatpush1.bf16.msra.mxu0 %v558
      %642 = vmatprep.subr.bf16.mxu0 0
      %643 = vmatpush1.bf16.msra.mxu0 %v559
      %644 = vmatprep.subr.bf16.mxu0 0
      %645 = vmatpush1.bf16.msra.mxu0 0
      %646 = vmatprep.subr.bf16.mxu0 0
      %647 = vmatpush1.bf16.msra.mxu0 0
      %648 = vmatprep.subr.bf16.mxu0 0
      %649 = vmatpush1.bf16.msra.mxu0 0
      %650 = vmatprep.subr.bf16.mxu0 0
      %651 = vmatpush1.bf16.msra.mxu0 0
      %652 = vmatprep.subr.bf16.mxu0 0
      %653 = vmatpush1.bf16.msra.mxu0 0
      %654 = vmatprep.subr.bf16.mxu0 0
      %655 = vmatpush1.bf16.msra.mxu0 0
      %656 = vmatprep.subr.bf16.mxu0 0
      %657 = vmatpush1.bf16.msra.mxu0 0
      %658 = vmatprep.subr.bf16.mxu0 0
      %659 = vmatpush1.bf16.msra.mxu0 0
      %660 = vmatprep.subr.bf16.mxu0 0
      %661 = vmatpush1.bf16.msra.mxu0 0
      %662 = vmatprep.subr.bf16.mxu0 0
      %663 = vmatpush1.bf16.msra.mxu0 0
      %664 = vmatprep.subr.bf16.mxu0 0
      %665 = vmatpush1.bf16.msra.mxu0 0
      %666 = vmatprep.subr.bf16.mxu0 0
      %667 = vmatpush1.bf16.msra.mxu0 0
      %668 = vmatprep.subr.bf16.mxu0 0
      %669 = vmatpush1.bf16.msra.mxu0 0
      %670 = vmatprep.subr.bf16.mxu0 0
      %671 = vmatpush1.bf16.msra.mxu0 0
      %672 = vmatprep.mubr.bf16.mxu0 0
      %673 = vmatmul.mubr.bf16.gmra.mrb[0].mxu0 %v638
      %v674 = vpop.f32.mrb[0].mxu0
      %v675 = vadd.f32 0.0, %v674
      %v676 = vpop.f32.mrb[0].mxu0
      %v677 = vpop.f32.mrb[0].mxu0
      %v678 = vpop.f32.mrb[0].mxu0
      %679 = vdwg.mxu0
      %v680 = vadd.f32 %v633, %v675
      %v681 = vmul.f32 %v680, %v382
      %v682 = vtanh.pop %v681
      %v683 = vmul.f32 %v682, %v382
      %v684 = vadd.f32 %v683, %v383
      %v685 = vmul.f32 %v684, %v620
      %687 = vrot.lane.b32.xlu0 %v684, 64
      %v688 = vpop.permute.xlu0 %687
      %v690 = vmul.f32 %v684, %v688
      %692 = vrot.lane.b32.xlu0 %v690, 32
      %v693 = vpop.permute.xlu0 %692
      %v695 = vadd.f32 %v685, %v693
      %v696 = vtanh.pop %v695
      %698 = vrot.lane.b32.xlu0 %v696, 64
      %v699 = vpop.permute.xlu0 %698
      %v701 = vmul.f32 %v684, %v699
      %v702 = vpack.c.bf16 %v701, %v701
      %704 = vrot.lane.b32.xlu0 %v701, 32
      %v705 = vpop.permute.xlu0 %704
      %707 = vst.msk [vmem:[#allocation3 + $0x10] sm:$0xff] %vm544, %v705
      %v708 = vld [vmem:[#allocation2 + $0x18] sm:$0xff]
      %710 = vrot.lane.b32.xlu0 %v702, 32
      %v711 = vpop.permute.xlu0 %710
      %v713 = vsel %vm544, %v711, 0
      %715 = vmatprep.subr.bf16.mxu0 0
      %716 = vmatpush1.bf16.msra.mxu0 %v558
      %717 = vmatprep.subr.bf16.mxu0 0
      %718 = vmatpush1.bf16.msra.mxu0 %v559
      %719 = vmatprep.subr.bf16.mxu0 0
      %720 = vmatpush1.bf16.msra.mxu0 0
      %721 = vmatprep.subr.bf16.mxu0 0
      %722 = vmatpush1.bf16.msra.mxu0 0
      %723 = vmatprep.subr.bf16.mxu0 0
      %724 = vmatpush1.bf16.msra.mxu0 0
      %725 = vmatprep.subr.bf16.mxu0 0
      %726 = vmatpush1.bf16.msra.mxu0 0
      %727 = vmatprep.subr.bf16.mxu0 0
      %728 = vmatpush1.bf16.msra.mxu0 0
      %729 = vmatprep.subr.bf16.mxu0 0
      %730 = vmatpush1.bf16.msra.mxu0 0
      %731 = vmatprep.subr.bf16.mxu0 0
      %732 = vmatpush1.bf16.msra.mxu0 0
      %733 = vmatprep.subr.bf16.mxu0 0
      %734 = vmatpush1.bf16.msra.mxu0 0
      %735 = vmatprep.subr.bf16.mxu0 0
      %736 = vmatpush1.bf16.msra.mxu0 0
      %737 = vmatprep.subr.bf16.mxu0 0
      %738 = vmatpush1.bf16.msra.mxu0 0
      %739 = vmatprep.subr.bf16.mxu0 0
      %740 = vmatpush1.bf16.msra.mxu0 0
      %741 = vmatprep.subr.bf16.mxu0 0
      %742 = vmatpush1.bf16.msra.mxu0 0
      %743 = vmatprep.subr.bf16.mxu0 0
      %744 = vmatpush1.bf16.msra.mxu0 0
      %745 = vmatprep.subr.bf16.mxu0 0
      %746 = vmatpush1.bf16.msra.mxu0 0
      %747 = vmatprep.mubr.bf16.mxu0 0
      %748 = vmatmul.mubr.bf16.gmra.mrb[0].mxu0 %v713
      %v749 = vpop.f32.mrb[0].mxu0
      %v750 = vadd.f32 0.0, %v749
      %v751 = vpop.f32.mrb[0].mxu0
      %v752 = vpop.f32.mrb[0].mxu0
      %v753 = vpop.f32.mrb[0].mxu0
      %754 = vdwg.mxu0
      %v755 = vadd.f32 %v708, %v750
      %v756 = vmul.f32 %v755, %v382
      %v757 = vtanh.pop %v756
      %v758 = vmul.f32 %v757, %v382
      %v759 = vadd.f32 %v758, %v383
      %v760 = vmul.f32 %v759, %v695
      %762 = vrot.lane.b32.xlu0 %v759, 64
      %v763 = vpop.permute.xlu0 %762
      %v765 = vmul.f32 %v759, %v763
      %767 = vrot.lane.b32.xlu0 %v765, 32
      %v768 = vpop.permute.xlu0 %767
      %v770 = vadd.f32 %v760, %v768
      %v771 = vtanh.pop %v770
      %773 = vrot.lane.b32.xlu0 %v771, 64
      %v774 = vpop.permute.xlu0 %773
      %v776 = vmul.f32 %v759, %v774
      %v777 = vpack.c.bf16 %v776, %v776
      %779 = vrot.lane.b32.xlu0 %v776, 32
      %v780 = vpop.permute.xlu0 %779
      %782 = vst.msk [vmem:[#allocation3 + $0x18] sm:$0xff] %vm544, %v780
      %v783 = vld [vmem:[#allocation2 + $0x20] sm:$0xff]
      %785 = vrot.lane.b32.xlu0 %v777, 32
      %v786 = vpop.permute.xlu0 %785
      %v788 = vsel %vm544, %v786, 0
      %790 = vmatprep.subr.bf16.mxu0 0
      %791 = vmatpush1.bf16.msra.mxu0 %v558
      %792 = vmatprep.subr.bf16.mxu0 0
      %793 = vmatpush1.bf16.msra.mxu0 %v559
      %794 = vmatprep.subr.bf16.mxu0 0
      %795 = vmatpush1.bf16.msra.mxu0 0
      %796 = vmatprep.subr.bf16.mxu0 0
      %797 = vmatpush1.bf16.msra.mxu0 0
      %798 = vmatprep.subr.bf16.mxu0 0
      %799 = vmatpush1.bf16.msra.mxu0 0
      %800 = vmatprep.subr.bf16.mxu0 0
      %801 = vmatpush1.bf16.msra.mxu0 0
      %802 = vmatprep.subr.bf16.mxu0 0
      %803 = vmatpush1.bf16.msra.mxu0 0
      %804 = vmatprep.subr.bf16.mxu0 0
      %805 = vmatpush1.bf16.msra.mxu0 0
      %806 = vmatprep.subr.bf16.mxu0 0
      %807 = vmatpush1.bf16.msra.mxu0 0
      %808 = vmatprep.subr.bf16.mxu0 0
      %809 = vmatpush1.bf16.msra.mxu0 0
      %810 = vmatprep.subr.bf16.mxu0 0
      %811 = vmatpush1.bf16.msra.mxu0 0
      %812 = vmatprep.subr.bf16.mxu0 0
      %813 = vmatpush1.bf16.msra.mxu0 0
      %814 = vmatprep.subr.bf16.mxu0 0
      %815 = vmatpush1.bf16.msra.mxu0 0
      %816 = vmatprep.subr.bf16.mxu0 0
      %817 = vmatpush1.bf16.msra.mxu0 0
      %818 = vmatprep.subr.bf16.mxu0 0
      %819 = vmatpush1.bf16.msra.mxu0 0
      %820 = vmatprep.subr.bf16.mxu0 0
      %821 = vmatpush1.bf16.msra.mxu0 0
      %822 = vmatprep.mubr.bf16.mxu0 0
      %823 = vmatmul.mubr.bf16.gmra.mrb[0].mxu0 %v788
      %v824 = vpop.f32.mrb[0].mxu0
      %v825 = vadd.f32 0.0, %v824
      %v826 = vpop.f32.mrb[0].mxu0
      %v827 = vpop.f32.mrb[0].mxu0
      %v828 = vpop.f32.mrb[0].mxu0
      %829 = vdwg.mxu0
      %v830 = vadd.f32 %v783, %v825
      %v831 = vmul.f32 %v830, %v382
      %v832 = vtanh.pop %v831
      %v833 = vmul.f32 %v832, %v382
      %v834 = vadd.f32 %v833, %v383
      %v835 = vmul.f32 %v834, %v770
      %837 = vrot.lane.b32.xlu0 %v834, 64
      %v838 = vpop.permute.xlu0 %837
      %v840 = vmul.f32 %v834, %v838
      %842 = vrot.lane.b32.xlu0 %v840, 32
      %v843 = vpop.permute.xlu0 %842
      %v845 = vadd.f32 %v835, %v843
      %v846 = vtanh.pop %v845
      %848 = vrot.lane.b32.xlu0 %v846, 64
      %v849 = vpop.permute.xlu0 %848
      %v851 = vmul.f32 %v834, %v849
      %v852 = vpack.c.bf16 %v851, %v851
      %854 = vrot.lane.b32.xlu0 %v851, 32
      %v855 = vpop.permute.xlu0 %854
      %857 = vst.msk [vmem:[#allocation3 + $0x20] sm:$0xff] %vm544, %v855
      %v858 = vld [vmem:[#allocation2 + $0x28] sm:$0xff]
      %860 = vrot.lane.b32.xlu0 %v852, 32
      %v861 = vpop.permute.xlu0 %860
      %v863 = vsel %vm544, %v861, 0
      %865 = vmatprep.subr.bf16.mxu0 0
      %866 = vmatpush1.bf16.msra.mxu0 %v558
      %867 = vmatprep.subr.bf16.mxu0 0
      %868 = vmatpush1.bf16.msra.mxu0 %v559
      %869 = vmatprep.subr.bf16.mxu0 0
      %870 = vmatpush1.bf16.msra.mxu0 0
      %871 = vmatprep.subr.bf16.mxu0 0
      %872 = vmatpush1.bf16.msra.mxu0 0
      %873 = vmatprep.subr.bf16.mxu0 0
      %874 = vmatpush1.bf16.msra.mxu0 0
      %875 = vmatprep.subr.bf16.mxu0 0
      %876 = vmatpush1.bf16.msra.mxu0 0
      %877 = vmatprep.subr.bf16.mxu0 0
      %878 = vmatpush1.bf16.msra.mxu0 0
      %879 = vmatprep.subr.bf16.mxu0 0
      %880 = vmatpush1.bf16.msra.mxu0 0
      %881 = vmatprep.subr.bf16.mxu0 0
      %882 = vmatpush1.bf16.msra.mxu0 0
      %883 = vmatprep.subr.bf16.mxu0 0
      %884 = vmatpush1.bf16.msra.mxu0 0
      %885 = vmatprep.subr.bf16.mxu0 0
      %886 = vmatpush1.bf16.msra.mxu0 0
      %887 = vmatprep.subr.bf16.mxu0 0
      %888 = vmatpush1.bf16.msra.mxu0 0
      %889 = vmatprep.subr.bf16.mxu0 0
      %890 = vmatpush1.bf16.msra.mxu0 0
      %891 = vmatprep.subr.bf16.mxu0 0
      %892 = vmatpush1.bf16.msra.mxu0 0
      %893 = vmatprep.subr.bf16.mxu0 0
      %894 = vmatpush1.bf16.msra.mxu0 0
      %895 = vmatprep.subr.bf16.mxu0 0
      %896 = vmatpush1.bf16.msra.mxu0 0
      %897 = vmatprep.mubr.bf16.mxu0 0
      %898 = vmatmul.mubr.bf16.gmra.mrb[0].mxu0 %v863
      %v899 = vpop.f32.mrb[0].mxu0
      %v900 = vadd.f32 0.0, %v899
      %v901 = vpop.f32.mrb[0].mxu0
      %v902 = vpop.f32.mrb[0].mxu0
      %v903 = vpop.f32.mrb[0].mxu0
      %904 = vdwg.mxu0
      %v905 = vadd.f32 %v858, %v900
      %v906 = vmul.f32 %v905, %v382
      %v907 = vtanh.pop %v906
      %v908 = vmul.f32 %v907, %v382
      %v909 = vadd.f32 %v908, %v383
      %v910 = vmul.f32 %v909, %v845
      %912 = vrot.lane.b32.xlu0 %v909, 64
      %v913 = vpop.permute.xlu0 %912
      %v915 = vmul.f32 %v909, %v913
      %917 = vrot.lane.b32.xlu0 %v915, 32
      %v918 = vpop.permute.xlu0 %917
      %v920 = vadd.f32 %v910, %v918
      %v921 = vtanh.pop %v920
      %923 = vrot.lane.b32.xlu0 %v921, 64
      %v924 = vpop.permute.xlu0 %923
      %v926 = vmul.f32 %v909, %v924
      %v927 = vpack.c.bf16 %v926, %v926
      %929 = vrot.lane.b32.xlu0 %v926, 32
      %v930 = vpop.permute.xlu0 %929
      %932 = vst.msk [vmem:[#allocation3 + $0x28] sm:$0xff] %vm544, %v930
      %v933 = vld [vmem:[#allocation2 + $0x30] sm:$0xff]
      %935 = vrot.lane.b32.xlu0 %v927, 32
      %v936 = vpop.permute.xlu0 %935
      %v938 = vsel %vm544, %v936, 0
      %940 = vmatprep.subr.bf16.mxu0 0
      %941 = vmatpush1.bf16.msra.mxu0 %v558
      %942 = vmatprep.subr.bf16.mxu0 0
      %943 = vmatpush1.bf16.msra.mxu0 %v559
      %944 = vmatprep.subr.bf16.mxu0 0
      %945 = vmatpush1.bf16.msra.mxu0 0
      %946 = vmatprep.subr.bf16.mxu0 0
      %947 = vmatpush1.bf16.msra.mxu0 0
      %948 = vmatprep.subr.bf16.mxu0 0
      %949 = vmatpush1.bf16.msra.mxu0 0
      %950 = vmatprep.subr.bf16.mxu0 0
      %951 = vmatpush1.bf16.msra.mxu0 0
      %952 = vmatprep.subr.bf16.mxu0 0
      %953 = vmatpush1.bf16.msra.mxu0 0
      %954 = vmatprep.subr.bf16.mxu0 0
      %955 = vmatpush1.bf16.msra.mxu0 0
      %956 = vmatprep.subr.bf16.mxu0 0
      %957 = vmatpush1.bf16.msra.mxu0 0
      %958 = vmatprep.subr.bf16.mxu0 0
      %959 = vmatpush1.bf16.msra.mxu0 0
      %960 = vmatprep.subr.bf16.mxu0 0
      %961 = vmatpush1.bf16.msra.mxu0 0
      %962 = vmatprep.subr.bf16.mxu0 0
      %963 = vmatpush1.bf16.msra.mxu0 0
      %964 = vmatprep.subr.bf16.mxu0 0
      %965 = vmatpush1.bf16.msra.mxu0 0
      %966 = vmatprep.subr.bf16.mxu0 0
      %967 = vmatpush1.bf16.msra.mxu0 0
      %968 = vmatprep.subr.bf16.mxu0 0
      %969 = vmatpush1.bf16.msra.mxu0 0
      %970 = vmatprep.subr.bf16.mxu0 0
      %971 = vmatpush1.bf16.msra.mxu0 0
      %972 = vmatprep.mubr.bf16.mxu0 0
      %973 = vmatmul.mubr.bf16.gmra.mrb[0].mxu0 %v938
      %v974 = vpop.f32.mrb[0].mxu0
      %v975 = vadd.f32 0.0, %v974
      %v976 = vpop.f32.mrb[0].mxu0
      %v977 = vpop.f32.mrb[0].mxu0
      %v978 = vpop.f32.mrb[0].mxu0
      %979 = vdwg.mxu0
      %v980 = vadd.f32 %v933, %v975
      %v981 = vmul.f32 %v980, %v382
      %v982 = vtanh.pop %v981
      %v983 = vmul.f32 %v982, %v382
      %v984 = vadd.f32 %v983, %v383
      %v985 = vmul.f32 %v984, %v920
      %987 = vrot.lane.b32.xlu0 %v984, 64
      %v988 = vpop.permute.xlu0 %987
      %v990 = vmul.f32 %v984, %v988
      %992 = vrot.lane.b32.xlu0 %v990, 32
      %v993 = vpop.permute.xlu0 %992
      %v995 = vadd.f32 %v985, %v993
      %v996 = vtanh.pop %v995
      %998 = vrot.lane.b32.xlu0 %v996, 64
      %v999 = vpop.permute.xlu0 %998
      %v1001 = vmul.f32 %v984, %v999
      %v1002 = vpack.c.bf16 %v1001, %v1001
      %1004 = vrot.lane.b32.xlu0 %v1001, 32
      %v1005 = vpop.permute.xlu0 %1004
      %1007 = vst.msk [vmem:[#allocation3 + $0x30] sm:$0xff] %vm544, %v1005
      %v1008 = vld [vmem:[#allocation2 + $0x38] sm:$0xff]
      %1010 = vrot.lane.b32.xlu0 %v1002, 32
      %v1011 = vpop.permute.xlu0 %1010
      %v1013 = vsel %vm544, %v1011, 0
      %1015 = vmatprep.subr.bf16.mxu0 0
      %1016 = vmatpush1.bf16.msra.mxu0 %v558
      %1017 = vmatprep.subr.bf16.mxu0 0
      %1018 = vmatpush1.bf16.msra.mxu0 %v559
      %1019 = vmatprep.subr.bf16.mxu0 0
      %1020 = vmatpush1.bf16.msra.mxu0 0
      %1021 = vmatprep.subr.bf16.mxu0 0
      %1022 = vmatpush1.bf16.msra.mxu0 0
      %1023 = vmatprep.subr.bf16.mxu0 0
      %1024 = vmatpush1.bf16.msra.mxu0 0
      %1025 = vmatprep.subr.bf16.mxu0 0
      %1026 = vmatpush1.bf16.msra.mxu0 0
      %1027 = vmatprep.subr.bf16.mxu0 0
      %1028 = vmatpush1.bf16.msra.mxu0 0
      %1029 = vmatprep.subr.bf16.mxu0 0
      %1030 = vmatpush1.bf16.msra.mxu0 0
      %1031 = vmatprep.subr.bf16.mxu0 0
      %1032 = vmatpush1.bf16.msra.mxu0 0
      %1033 = vmatprep.subr.bf16.mxu0 0
      %1034 = vmatpush1.bf16.msra.mxu0 0
      %1035 = vmatprep.subr.bf16.mxu0 0
      %1036 = vmatpush1.bf16.msra.mxu0 0
      %1037 = vmatprep.subr.bf16.mxu0 0
      %1038 = vmatpush1.bf16.msra.mxu0 0
      %1039 = vmatprep.subr.bf16.mxu0 0
      %1040 = vmatpush1.bf16.msra.mxu0 0
      %1041 = vmatprep.subr.bf16.mxu0 0
      %1042 = vmatpush1.bf16.msra.mxu0 0
      %1043 = vmatprep.subr.bf16.mxu0 0
      %1044 = vmatpush1.bf16.msra.mxu0 0
      %1045 = vmatprep.subr.bf16.mxu0 0
      %1046 = vmatpush1.bf16.msra.mxu0 0
      %1047 = vmatprep.mubr.bf16.mxu0 0
      %1048 = vmatmul.mubr.bf16.gmra.mrb[0].mxu0 %v1013
      %v1049 = vpop.f32.mrb[0].mxu0
      %v1050 = vadd.f32 0.0, %v1049
      %v1051 = vpop.f32.mrb[0].mxu0
      %v1052 = vpop.f32.mrb[0].mxu0
      %v1053 = vpop.f32.mrb[0].mxu0
      %1054 = vdwg.mxu0
      %v1055 = vadd.f32 %v1008, %v1050
      %v1056 = vmul.f32 %v1055, %v382
      %v1057 = vtanh.pop %v1056
      %v1058 = vmul.f32 %v1057, %v382
      %v1059 = vadd.f32 %v1058, %v383
      %v1060 = vmul.f32 %v1059, %v995
      %1062 = vrot.lane.b32.xlu0 %v1059, 64
      %v1063 = vpop.permute.xlu0 %1062
      %v1065 = vmul.f32 %v1059, %v1063
      %1067 = vrot.lane.b32.xlu0 %v1065, 32
      %v1068 = vpop.permute.xlu0 %1067
      %v1070 = vadd.f32 %v1060, %v1068
      %v1071 = vtanh.pop %v1070
      %1073 = vrot.lane.b32.xlu0 %v1071, 64
      %v1074 = vpop.permute.xlu0 %1073
      %v1076 = vmul.f32 %v1059, %v1074
      %1078 = vrot.lane.b32.xlu0 %v1076, 32
      %v1079 = vpop.permute.xlu0 %1078
      %1081 = vst.msk [vmem:[#allocation3 + $0x38] sm:$0xff] %vm544, %v1079
      %v1082 = vld [vmem:[%s5] sm:$0xf]
      %v1083 = vld [vmem:[%s5 + $0x4] sm:$0xf]
      %v1084 = vld [vmem:[%s5 + $0x8] sm:$0xf]
      %v1085 = vld [vmem:[%s5 + $0xc] sm:$0xf]
      %v1086 = vld [vmem:[%s7] sm:$0x1]
      %v1087 = vld [vmem:[#allocation3] sm:$0xff]
      %v1088 = vld [vmem:[#allocation3 + $0x8] sm:$0xff]
      %v1089 = vld [vmem:[#allocation3 + $0x10] sm:$0xff]
      %v1090 = vld [vmem:[#allocation3 + $0x18] sm:$0xff]
      %v1091 = vld [vmem:[#allocation3 + $0x20] sm:$0xff]
      %v1092 = vld [vmem:[#allocation3 + $0x28] sm:$0xff]
      %v1093 = vld [vmem:[#allocation3 + $0x30] sm:$0xff]
      %v1094 = vld [vmem:[#allocation3 + $0x38] sm:$0xff]
      %v1095 = vpack.c.bf16 %v1088, %v1087
      %v1096 = vpack.c.bf16 %v1090, %v1089
      %v1097 = vpack.c.bf16 %v1092, %v1091
      %v1098 = vpack.c.bf16 %v1094, %v1093
      %v1100 = vlaneseq
      %v1101 = vshrl.u32 %v1100, 7
      %v1102 = vsub.s32 0, %v1101
      %v1103 = vrot.slane %v1086, %v1102
      %v1109 = vunpack.c.l.b16 %v1082
      %v1110 = vunpack.c.l.b16 %v1083
      %v1111 = vunpack.c.l.b16 %v1084
      %v1112 = vunpack.c.l.b16 %v1085
      %v1113 = vpack.c.b16 %v1110, %v1109
      %v1114 = vpack.c.b16 %v1112, %v1111
      %v1118 = vsel %vm544, %v1095, 0
      %v1121 = vsel %vm544, %v1096, 0
      %v1124 = vsel %vm544, %v1097, 0
      %v1127 = vsel %vm544, %v1098, 0
      %1129 = vmatprep.subr.bf16.mxu0 0
      %1130 = vmatpush1.bf16.msra.mxu0 %v1113
      %1131 = vmatprep.subr.bf16.mxu0 0
      %1132 = vmatpush1.bf16.msra.mxu0 %v1114
      %1133 = vmatprep.subr.bf16.mxu0 0
      %1134 = vmatpush1.bf16.msra.mxu0 0
      %1135 = vmatprep.subr.bf16.mxu0 0
      %1136 = vmatpush1.bf16.msra.mxu0 0
      %1137 = vmatprep.subr.bf16.mxu0 0
      %1138 = vmatpush1.bf16.msra.mxu0 0
      %1139 = vmatprep.subr.bf16.mxu0 0
      %1140 = vmatpush1.bf16.msra.mxu0 0
      %1141 = vmatprep.subr.bf16.mxu0 0
      %1142 = vmatpush1.bf16.msra.mxu0 0
      %1143 = vmatprep.subr.bf16.mxu0 0
      %1144 = vmatpush1.bf16.msra.mxu0 0
      %1145 = vmatprep.subr.bf16.mxu0 0
      %1146 = vmatpush1.bf16.msra.mxu0 0
      %1147 = vmatprep.subr.bf16.mxu0 0
      %1148 = vmatpush1.bf16.msra.mxu0 0
      %1149 = vmatprep.subr.bf16.mxu0 0
      %1150 = vmatpush1.bf16.msra.mxu0 0
      %1151 = vmatprep.subr.bf16.mxu0 0
      %1152 = vmatpush1.bf16.msra.mxu0 0
      %1153 = vmatprep.subr.bf16.mxu0 0
      %1154 = vmatpush1.bf16.msra.mxu0 0
      %1155 = vmatprep.subr.bf16.mxu0 0
      %1156 = vmatpush1.bf16.msra.mxu0 0
      %1157 = vmatprep.subr.bf16.mxu0 0
      %1158 = vmatpush1.bf16.msra.mxu0 0
      %1159 = vmatprep.subr.bf16.mxu0 0
      %1160 = vmatpush1.bf16.msra.mxu0 0
      %1161 = vmatprep.mubr.bf16.mxu0 0
      %1162 = vmatmul.mubr.bf16.gmra.mrb[0].mxu0 %v1118
      %v1163 = vpop.f32.mrb[0].mxu0
      %v1164 = vadd.f32 %v1103, %v1163
      %v1165 = vpop.f32.mrb[0].mxu0
      %v1166 = vpop.f32.mrb[0].mxu0
      %v1167 = vadd.f32 %v1103, %v1166
      %v1168 = vpop.f32.mrb[0].mxu0
      %1169 = vmatprep.mubr.bf16.mxu0 0
      %1170 = vmatmul.mubr.bf16.gmra.mrb[0].mxu0 %v1121
      %v1171 = vpop.f32.mrb[0].mxu0
      %v1172 = vadd.f32 %v1103, %v1171
      %v1173 = vpop.f32.mrb[0].mxu0
      %v1174 = vpop.f32.mrb[0].mxu0
      %v1175 = vadd.f32 %v1103, %v1174
      %v1176 = vpop.f32.mrb[0].mxu0
      %1177 = vmatprep.mubr.bf16.mxu0 0
      %1178 = vmatmul.mubr.bf16.gmra.mrb[0].mxu0 %v1124
      %v1179 = vpop.f32.mrb[0].mxu0
      %v1180 = vadd.f32 %v1103, %v1179
      %v1181 = vpop.f32.mrb[0].mxu0
      %v1182 = vpop.f32.mrb[0].mxu0
      %v1183 = vadd.f32 %v1103, %v1182
      %v1184 = vpop.f32.mrb[0].mxu0
      %1185 = vmatprep.mubr.bf16.mxu0 0
      %1186 = vmatmul.mubr.bf16.gmra.mrb[0].mxu0 %v1127
      %v1187 = vpop.f32.mrb[0].mxu0
      %v1188 = vadd.f32 %v1103, %v1187
      %v1189 = vpop.f32.mrb[0].mxu0
      %v1190 = vpop.f32.mrb[0].mxu0
      %v1191 = vadd.f32 %v1103, %v1190
      %v1192 = vpop.f32.mrb[0].mxu0
      %1193 = vdwg.mxu0
      %1194 = vst [vmem:[#allocation2] sm:$0xff] %v1164
      %1195 = vst [vmem:[#allocation2 + $0x8] sm:$0xff] %v1167
      %1196 = vst [vmem:[#allocation2 + $0x10] sm:$0xff] %v1172
      %1197 = vst [vmem:[#allocation2 + $0x18] sm:$0xff] %v1175
      %1198 = vst [vmem:[#allocation2 + $0x20] sm:$0xff] %v1180
      %1199 = vst [vmem:[#allocation2 + $0x28] sm:$0xff] %v1183
      %1200 = vst [vmem:[#allocation2 + $0x30] sm:$0xff] %v1188
      %1201 = vst [vmem:[#allocation2 + $0x38] sm:$0xff] %v1191
      %v1202 = vld [vmem:[%s6] sm:$0xf]
      %v1203 = vld [vmem:[%s6 + $0x4] sm:$0xf]
      %v1204 = vld [vmem:[%s6 + $0x8] sm:$0xf]
      %v1205 = vld [vmem:[%s6 + $0xc] sm:$0xf]
      %v1206 = vld [vmem:[#allocation2] sm:$0xff]
      %v1207 = vmul.f32 %v1206, %v382
      %v1208 = vtanh.pop %v1207
      %v1209 = vmul.f32 %v1208, %v382
      %v1210 = vadd.f32 %v1209, %v383
      %v1211 = vmul.f32 %v1210, 0.0
      %1213 = vrot.lane.b32.xlu0 %v1210, 64
      %v1214 = vpop.permute.xlu0 %1213
      %v1216 = vmul.f32 %v1210, %v1214
      %1218 = vrot.lane.b32.xlu0 %v1216, 32
      %v1219 = vpop.permute.xlu0 %1218
      %v1221 = vadd.f32 %v1211, %v1219
      %v1222 = vtanh.pop %v1221
      %1224 = vrot.lane.b32.xlu0 %v1222, 64
      %v1225 = vpop.permute.xlu0 %1224
      %v1227 = vmul.f32 %v1210, %v1225
      %v1228 = vpack.c.bf16 %v1227, %v1227
      %1230 = vrot.lane.b32.xlu0 %v1227, 32
      %v1231 = vpop.permute.xlu0 %1230
      %1233 = vst.msk [vmem:[#allocation3] sm:$0xff] %vm544, %v1231
      %v1234 = vld [vmem:[#allocation2 + $0x8] sm:$0xff]
      %1236 = vrot.lane.b32.xlu0 %v1228, 32
      %v1237 = vpop.permute.xlu0 %1236
      %v1242 = vunpack.c.l.b16 %v1202
      %v1243 = vunpack.c.l.b16 %v1203
      %v1244 = vunpack.c.l.b16 %v1204
      %v1245 = vunpack.c.l.b16 %v1205
      %v1246 = vpack.c.b16 %v1243, %v1242
      %v1247 = vpack.c.b16 %v1245, %v1244
      %v1251 = vsel %vm544, %v1237, 0
      %1253 = vmatprep.subr.bf16.mxu0 0
      %1254 = vmatpush1.bf16.msra.mxu0 %v1246
      %1255 = vmatprep.subr.bf16.mxu0 0
      %1256 = vmatpush1.bf16.msra.mxu0 %v1247
      %1257 = vmatprep.subr.bf16.mxu0 0
      %1258 = vmatpush1.bf16.msra.mxu0 0
      %1259 = vmatprep.subr.bf16.mxu0 0
      %1260 = vmatpush1.bf16.msra.mxu0 0
      %1261 = vmatprep.subr.bf16.mxu0 0
      %1262 = vmatpush1.bf16.msra.mxu0 0
      %1263 = vmatprep.subr.bf16.mxu0 0
      %1264 = vmatpush1.bf16.msra.mxu0 0
      %1265 = vmatprep.subr.bf16.mxu0 0
      %1266 = vmatpush1.bf16.msra.mxu0 0
      %1267 = vmatprep.subr.bf16.mxu0 0
      %1268 = vmatpush1.bf16.msra.mxu0 0
      %1269 = vmatprep.subr.bf16.mxu0 0
      %1270 = vmatpush1.bf16.msra.mxu0 0
      %1271 = vmatprep.subr.bf16.mxu0 0
      %1272 = vmatpush1.bf16.msra.mxu0 0
      %1273 = vmatprep.subr.bf16.mxu0 0
      %1274 = vmatpush1.bf16.msra.mxu0 0
      %1275 = vmatprep.subr.bf16.mxu0 0
      %1276 = vmatpush1.bf16.msra.mxu0 0
      %1277 = vmatprep.subr.bf16.mxu0 0
      %1278 = vmatpush1.bf16.msra.mxu0 0
      %1279 = vmatprep.subr.bf16.mxu0 0
      %1280 = vmatpush1.bf16.msra.mxu0 0
      %1281 = vmatprep.subr.bf16.mxu0 0
      %1282 = vmatpush1.bf16.msra.mxu0 0
      %1283 = vmatprep.subr.bf16.mxu0 0
      %1284 = vmatpush1.bf16.msra.mxu0 0
      %1285 = vmatprep.mubr.bf16.mxu0 0
      %1286 = vmatmul.mubr.bf16.gmra.mrb[0].mxu0 %v1251
      %v1287 = vpop.f32.mrb[0].mxu0
      %v1288 = vadd.f32 0.0, %v1287
      %v1289 = vpop.f32.mrb[0].mxu0
      %v1290 = vpop.f32.mrb[0].mxu0
      %v1291 = vpop.f32.mrb[0].mxu0
      %1292 = vdwg.mxu0
      %v1293 = vadd.f32 %v1234, %v1288
      %v1294 = vmul.f32 %v1293, %v382
      %v1295 = vtanh.pop %v1294
      %v1296 = vmul.f32 %v1295, %v382
      %v1297 = vadd.f32 %v1296, %v383
      %v1298 = vmul.f32 %v1297, %v1221
      %1300 = vrot.lane.b32.xlu0 %v1297, 64
      %v1301 = vpop.permute.xlu0 %1300
      %v1303 = vmul.f32 %v1297, %v1301
      %1305 = vrot.lane.b32.xlu0 %v1303, 32
      %v1306 = vpop.permute.xlu0 %1305
      %v1308 = vadd.f32 %v1298, %v1306
      %v1309 = vtanh.pop %v1308
      %1311 = vrot.lane.b32.xlu0 %v1309, 64
      %v1312 = vpop.permute.xlu0 %1311
      %v1314 = vmul.f32 %v1297, %v1312
      %v1315 = vpack.c.bf16 %v1314, %v1314
      %1317 = vrot.lane.b32.xlu0 %v1314, 32
      %v1318 = vpop.permute.xlu0 %1317
      %1320 = vst.msk [vmem:[#allocation3 + $0x8] sm:$0xff] %vm544, %v1318
      %v1321 = vld [vmem:[#allocation2 + $0x10] sm:$0xff]
      %1323 = vrot.lane.b32.xlu0 %v1315, 32
      %v1324 = vpop.permute.xlu0 %1323
      %v1326 = vsel %vm544, %v1324, 0
      %1328 = vmatprep.subr.bf16.mxu0 0
      %1329 = vmatpush1.bf16.msra.mxu0 %v1246
      %1330 = vmatprep.subr.bf16.mxu0 0
      %1331 = vmatpush1.bf16.msra.mxu0 %v1247
      %1332 = vmatprep.subr.bf16.mxu0 0
      %1333 = vmatpush1.bf16.msra.mxu0 0
      %1334 = vmatprep.subr.bf16.mxu0 0
      %1335 = vmatpush1.bf16.msra.mxu0 0
      %1336 = vmatprep.subr.bf16.mxu0 0
      %1337 = vmatpush1.bf16.msra.mxu0 0
      %1338 = vmatprep.subr.bf16.mxu0 0
      %1339 = vmatpush1.bf16.msra.mxu0 0
      %1340 = vmatprep.subr.bf16.mxu0 0
      %1341 = vmatpush1.bf16.msra.mxu0 0
      %1342 = vmatprep.subr.bf16.mxu0 0
      %1343 = vmatpush1.bf16.msra.mxu0 0
      %1344 = vmatprep.subr.bf16.mxu0 0
      %1345 = vmatpush1.bf16.msra.mxu0 0
      %1346 = vmatprep.subr.bf16.mxu0 0
      %1347 = vmatpush1.bf16.msra.mxu0 0
      %1348 = vmatprep.subr.bf16.mxu0 0
      %1349 = vmatpush1.bf16.msra.mxu0 0
      %1350 = vmatprep.subr.bf16.mxu0 0
      %1351 = vmatpush1.bf16.msra.mxu0 0
      %1352 = vmatprep.subr.bf16.mxu0 0
      %1353 = vmatpush1.bf16.msra.mxu0 0
      %1354 = vmatprep.subr.bf16.mxu0 0
      %1355 = vmatpush1.bf16.msra.mxu0 0
      %1356 = vmatprep.subr.bf16.mxu0 0
      %1357 = vmatpush1.bf16.msra.mxu0 0
      %1358 = vmatprep.subr.bf16.mxu0 0
      %1359 = vmatpush1.bf16.msra.mxu0 0
      %1360 = vmatprep.mubr.bf16.mxu0 0
      %1361 = vmatmul.mubr.bf16.gmra.mrb[0].mxu0 %v1326
      %v1362 = vpop.f32.mrb[0].mxu0
      %v1363 = vadd.f32 0.0, %v1362
      %v1364 = vpop.f32.mrb[0].mxu0
      %v1365 = vpop.f32.mrb[0].mxu0
      %v1366 = vpop.f32.mrb[0].mxu0
      %1367 = vdwg.mxu0
      %v1368 = vadd.f32 %v1321, %v1363
      %v1369 = vmul.f32 %v1368, %v382
      %v1370 = vtanh.pop %v1369
      %v1371 = vmul.f32 %v1370, %v382
      %v1372 = vadd.f32 %v1371, %v383
      %v1373 = vmul.f32 %v1372, %v1308
      %1375 = vrot.lane.b32.xlu0 %v1372, 64
      %v1376 = vpop.permute.xlu0 %1375
      %v1378 = vmul.f32 %v1372, %v1376
      %1380 = vrot.lane.b32.xlu0 %v1378, 32
      %v1381 = vpop.permute.xlu0 %1380
      %v1383 = vadd.f32 %v1373, %v1381
      %v1384 = vtanh.pop %v1383
      %1386 = vrot.lane.b32.xlu0 %v1384, 64
      %v1387 = vpop.permute.xlu0 %1386
      %v1389 = vmul.f32 %v1372, %v1387
      %v1390 = vpack.c.bf16 %v1389, %v1389
      %1392 = vrot.lane.b32.xlu0 %v1389, 32
      %v1393 = vpop.permute.xlu0 %1392
      %1395 = vst.msk [vmem:[#allocation3 + $0x10] sm:$0xff] %vm544, %v1393
      %v1396 = vld [vmem:[#allocation2 + $0x18] sm:$0xff]
      %1398 = vrot.lane.b32.xlu0 %v1390, 32
      %v1399 = vpop.permute.xlu0 %1398
      %v1401 = vsel %vm544, %v1399, 0
      %1403 = vmatprep.subr.bf16.mxu0 0
      %1404 = vmatpush1.bf16.msra.mxu0 %v1246
      %1405 = vmatprep.subr.bf16.mxu0 0
      %1406 = vmatpush1.bf16.msra.mxu0 %v1247
      %1407 = vmatprep.subr.bf16.mxu0 0
      %1408 = vmatpush1.bf16.msra.mxu0 0
      %1409 = vmatprep.subr.bf16.mxu0 0
      %1410 = vmatpush1.bf16.msra.mxu0 0
      %1411 = vmatprep.subr.bf16.mxu0 0
      %1412 = vmatpush1.bf16.msra.mxu0 0
      %1413 = vmatprep.subr.bf16.mxu0 0
      %1414 = vmatpush1.bf16.msra.mxu0 0
      %1415 = vmatprep.subr.bf16.mxu0 0
      %1416 = vmatpush1.bf16.msra.mxu0 0
      %1417 = vmatprep.subr.bf16.mxu0 0
      %1418 = vmatpush1.bf16.msra.mxu0 0
      %1419 = vmatprep.subr.bf16.mxu0 0
      %1420 = vmatpush1.bf16.msra.mxu0 0
      %1421 = vmatprep.subr.bf16.mxu0 0
      %1422 = vmatpush1.bf16.msra.mxu0 0
      %1423 = vmatprep.subr.bf16.mxu0 0
      %1424 = vmatpush1.bf16.msra.mxu0 0
      %1425 = vmatprep.subr.bf16.mxu0 0
      %1426 = vmatpush1.bf16.msra.mxu0 0
      %1427 = vmatprep.subr.bf16.mxu0 0
      %1428 = vmatpush1.bf16.msra.mxu0 0
      %1429 = vmatprep.subr.bf16.mxu0 0
      %1430 = vmatpush1.bf16.msra.mxu0 0
      %1431 = vmatprep.subr.bf16.mxu0 0
      %1432 = vmatpush1.bf16.msra.mxu0 0
      %1433 = vmatprep.subr.bf16.mxu0 0
      %1434 = vmatpush1.bf16.msra.mxu0 0
      %1435 = vmatprep.mubr.bf16.mxu0 0
      %1436 = vmatmul.mubr.bf16.gmra.mrb[0].mxu0 %v1401
      %v1437 = vpop.f32.mrb[0].mxu0
      %v1438 = vadd.f32 0.0, %v1437
      %v1439 = vpop.f32.mrb[0].mxu0
      %v1440 = vpop.f32.mrb[0].mxu0
      %v1441 = vpop.f32.mrb[0].mxu0
      %1442 = vdwg.mxu0
      %v1443 = vadd.f32 %v1396, %v1438
      %v1444 = vmul.f32 %v1443, %v382
      %v1445 = vtanh.pop %v1444
      %v1446 = vmul.f32 %v1445, %v382
      %v1447 = vadd.f32 %v1446, %v383
      %v1448 = vmul.f32 %v1447, %v1383
      %1450 = vrot.lane.b32.xlu0 %v1447, 64
      %v1451 = vpop.permute.xlu0 %1450
      %v1453 = vmul.f32 %v1447, %v1451
      %1455 = vrot.lane.b32.xlu0 %v1453, 32
      %v1456 = vpop.permute.xlu0 %1455
      %v1458 = vadd.f32 %v1448, %v1456
      %v1459 = vtanh.pop %v1458
      %1461 = vrot.lane.b32.xlu0 %v1459, 64
      %v1462 = vpop.permute.xlu0 %1461
      %v1464 = vmul.f32 %v1447, %v1462
      %v1465 = vpack.c.bf16 %v1464, %v1464
      %1467 = vrot.lane.b32.xlu0 %v1464, 32
      %v1468 = vpop.permute.xlu0 %1467
      %1470 = vst.msk [vmem:[#allocation3 + $0x18] sm:$0xff] %vm544, %v1468
      %v1471 = vld [vmem:[#allocation2 + $0x20] sm:$0xff]
      %1473 = vrot.lane.b32.xlu0 %v1465, 32
      %v1474 = vpop.permute.xlu0 %1473
      %v1476 = vsel %vm544, %v1474, 0
      %1478 = vmatprep.subr.bf16.mxu0 0
      %1479 = vmatpush1.bf16.msra.mxu0 %v1246
      %1480 = vmatprep.subr.bf16.mxu0 0
      %1481 = vmatpush1.bf16.msra.mxu0 %v1247
      %1482 = vmatprep.subr.bf16.mxu0 0
      %1483 = vmatpush1.bf16.msra.mxu0 0
      %1484 = vmatprep.subr.bf16.mxu0 0
      %1485 = vmatpush1.bf16.msra.mxu0 0
      %1486 = vmatprep.subr.bf16.mxu0 0
      %1487 = vmatpush1.bf16.msra.mxu0 0
      %1488 = vmatprep.subr.bf16.mxu0 0
      %1489 = vmatpush1.bf16.msra.mxu0 0
      %1490 = vmatprep.subr.bf16.mxu0 0
      %1491 = vmatpush1.bf16.msra.mxu0 0
      %1492 = vmatprep.subr.bf16.mxu0 0
      %1493 = vmatpush1.bf16.msra.mxu0 0
      %1494 = vmatprep.subr.bf16.mxu0 0
      %1495 = vmatpush1.bf16.msra.mxu0 0
      %1496 = vmatprep.subr.bf16.mxu0 0
      %1497 = vmatpush1.bf16.msra.mxu0 0
      %1498 = vmatprep.subr.bf16.mxu0 0
      %1499 = vmatpush1.bf16.msra.mxu0 0
      %1500 = vmatprep.subr.bf16.mxu0 0
      %1501 = vmatpush1.bf16.msra.mxu0 0
      %1502 = vmatprep.subr.bf16.mxu0 0
      %1503 = vmatpush1.bf16.msra.mxu0 0
      %1504 = vmatprep.subr.bf16.mxu0 0
      %1505 = vmatpush1.bf16.msra.mxu0 0
      %1506 = vmatprep.subr.bf16.mxu0 0
      %1507 = vmatpush1.bf16.msra.mxu0 0
      %1508 = vmatprep.subr.bf16.mxu0 0
      %1509 = vmatpush1.bf16.msra.mxu0 0
      %1510 = vmatprep.mubr.bf16.mxu0 0
      %1511 = vmatmul.mubr.bf16.gmra.mrb[0].mxu0 %v1476
      %v1512 = vpop.f32.mrb[0].mxu0
      %v1513 = vadd.f32 0.0, %v1512
      %v1514 = vpop.f32.mrb[0].mxu0
      %v1515 = vpop.f32.mrb[0].mxu0
      %v1516 = vpop.f32.mrb[0].mxu0
      %1517 = vdwg.mxu0
      %v1518 = vadd.f32 %v1471, %v1513
      %v1519 = vmul.f32 %v1518, %v382
      %v1520 = vtanh.pop %v1519
      %v1521 = vmul.f32 %v1520, %v382
      %v1522 = vadd.f32 %v1521, %v383
      %v1523 = vmul.f32 %v1522, %v1458
      %1525 = vrot.lane.b32.xlu0 %v1522, 64
      %v1526 = vpop.permute.xlu0 %1525
      %v1528 = vmul.f32 %v1522, %v1526
      %1530 = vrot.lane.b32.xlu0 %v1528, 32
      %v1531 = vpop.permute.xlu0 %1530
      %v1533 = vadd.f32 %v1523, %v1531
      %v1534 = vtanh.pop %v1533
      %1536 = vrot.lane.b32.xlu0 %v1534, 64
      %v1537 = vpop.permute.xlu0 %1536
      %v1539 = vmul.f32 %v1522, %v1537
      %v1540 = vpack.c.bf16 %v1539, %v1539
      %1542 = vrot.lane.b32.xlu0 %v1539, 32
      %v1543 = vpop.permute.xlu0 %1542
      %1545 = vst.msk [vmem:[#allocation3 + $0x20] sm:$0xff] %vm544, %v1543
      %v1546 = vld [vmem:[#allocation2 + $0x28] sm:$0xff]
      %1548 = vrot.lane.b32.xlu0 %v1540, 32
      %v1549 = vpop.permute.xlu0 %1548
      %v1551 = vsel %vm544, %v1549, 0
      %1553 = vmatprep.subr.bf16.mxu0 0
      %1554 = vmatpush1.bf16.msra.mxu0 %v1246
      %1555 = vmatprep.subr.bf16.mxu0 0
      %1556 = vmatpush1.bf16.msra.mxu0 %v1247
      %1557 = vmatprep.subr.bf16.mxu0 0
      %1558 = vmatpush1.bf16.msra.mxu0 0
      %1559 = vmatprep.subr.bf16.mxu0 0
      %1560 = vmatpush1.bf16.msra.mxu0 0
      %1561 = vmatprep.subr.bf16.mxu0 0
      %1562 = vmatpush1.bf16.msra.mxu0 0
      %1563 = vmatprep.subr.bf16.mxu0 0
      %1564 = vmatpush1.bf16.msra.mxu0 0
      %1565 = vmatprep.subr.bf16.mxu0 0
      %1566 = vmatpush1.bf16.msra.mxu0 0
      %1567 = vmatprep.subr.bf16.mxu0 0
      %1568 = vmatpush1.bf16.msra.mxu0 0
      %1569 = vmatprep.subr.bf16.mxu0 0
      %1570 = vmatpush1.bf16.msra.mxu0 0
      %1571 = vmatprep.subr.bf16.mxu0 0
      %1572 = vmatpush1.bf16.msra.mxu0 0
      %1573 = vmatprep.subr.bf16.mxu0 0
      %1574 = vmatpush1.bf16.msra.mxu0 0
      %1575 = vmatprep.subr.bf16.mxu0 0
      %1576 = vmatpush1.bf16.msra.mxu0 0
      %1577 = vmatprep.subr.bf16.mxu0 0
      %1578 = vmatpush1.bf16.msra.mxu0 0
      %1579 = vmatprep.subr.bf16.mxu0 0
      %1580 = vmatpush1.bf16.msra.mxu0 0
      %1581 = vmatprep.subr.bf16.mxu0 0
      %1582 = vmatpush1.bf16.msra.mxu0 0
      %1583 = vmatprep.subr.bf16.mxu0 0
      %1584 = vmatpush1.bf16.msra.mxu0 0
      %1585 = vmatprep.mubr.bf16.mxu0 0
      %1586 = vmatmul.mubr.bf16.gmra.mrb[0].mxu0 %v1551
      %v1587 = vpop.f32.mrb[0].mxu0
      %v1588 = vadd.f32 0.0, %v1587
      %v1589 = vpop.f32.mrb[0].mxu0
      %v1590 = vpop.f32.mrb[0].mxu0
      %v1591 = vpop.f32.mrb[0].mxu0
      %1592 = vdwg.mxu0
      %v1593 = vadd.f32 %v1546, %v1588
      %v1594 = vmul.f32 %v1593, %v382
      %v1595 = vtanh.pop %v1594
      %v1596 = vmul.f32 %v1595, %v382
      %v1597 = vadd.f32 %v1596, %v383
      %v1598 = vmul.f32 %v1597, %v1533
      %1600 = vrot.lane.b32.xlu0 %v1597, 64
      %v1601 = vpop.permute.xlu0 %1600
      %v1603 = vmul.f32 %v1597, %v1601
      %1605 = vrot.lane.b32.xlu0 %v1603, 32
      %v1606 = vpop.permute.xlu0 %1605
      %v1608 = vadd.f32 %v1598, %v1606
      %v1609 = vtanh.pop %v1608
      %1611 = vrot.lane.b32.xlu0 %v1609, 64
      %v1612 = vpop.permute.xlu0 %1611
      %v1614 = vmul.f32 %v1597, %v1612
      %v1615 = vpack.c.bf16 %v1614, %v1614
      %1617 = vrot.lane.b32.xlu0 %v1614, 32
      %v1618 = vpop.permute.xlu0 %1617
      %1620 = vst.msk [vmem:[#allocation3 + $0x28] sm:$0xff] %vm544, %v1618
      %v1621 = vld [vmem:[#allocation2 + $0x30] sm:$0xff]
      %1623 = vrot.lane.b32.xlu0 %v1615, 32
      %v1624 = vpop.permute.xlu0 %1623
      %v1626 = vsel %vm544, %v1624, 0
      %1628 = vmatprep.subr.bf16.mxu0 0
      %1629 = vmatpush1.bf16.msra.mxu0 %v1246
      %1630 = vmatprep.subr.bf16.mxu0 0
      %1631 = vmatpush1.bf16.msra.mxu0 %v1247
      %1632 = vmatprep.subr.bf16.mxu0 0
      %1633 = vmatpush1.bf16.msra.mxu0 0
      %1634 = vmatprep.subr.bf16.mxu0 0
      %1635 = vmatpush1.bf16.msra.mxu0 0
      %1636 = vmatprep.subr.bf16.mxu0 0
      %1637 = vmatpush1.bf16.msra.mxu0 0
      %1638 = vmatprep.subr.bf16.mxu0 0
      %1639 = vmatpush1.bf16.msra.mxu0 0
      %1640 = vmatprep.subr.bf16.mxu0 0
      %1641 = vmatpush1.bf16.msra.mxu0 0
      %1642 = vmatprep.subr.bf16.mxu0 0
      %1643 = vmatpush1.bf16.msra.mxu0 0
      %1644 = vmatprep.subr.bf16.mxu0 0
      %1645 = vmatpush1.bf16.msra.mxu0 0
      %1646 = vmatprep.subr.bf16.mxu0 0
      %1647 = vmatpush1.bf16.msra.mxu0 0
      %1648 = vmatprep.subr.bf16.mxu0 0
      %1649 = vmatpush1.bf16.msra.mxu0 0
      %1650 = vmatprep.subr.bf16.mxu0 0
      %1651 = vmatpush1.bf16.msra.mxu0 0
      %1652 = vmatprep.subr.bf16.mxu0 0
      %1653 = vmatpush1.bf16.msra.mxu0 0
      %1654 = vmatprep.subr.bf16.mxu0 0
      %1655 = vmatpush1.bf16.msra.mxu0 0
      %1656 = vmatprep.subr.bf16.mxu0 0
      %1657 = vmatpush1.bf16.msra.mxu0 0
      %1658 = vmatprep.subr.bf16.mxu0 0
      %1659 = vmatpush1.bf16.msra.mxu0 0
      %1660 = vmatprep.mubr.bf16.mxu0 0
      %1661 = vmatmul.mubr.bf16.gmra.mrb[0].mxu0 %v1626
      %v1662 = vpop.f32.mrb[0].mxu0
      %v1663 = vadd.f32 0.0, %v1662
      %v1664 = vpop.f32.mrb[0].mxu0
      %v1665 = vpop.f32.mrb[0].mxu0
      %v1666 = vpop.f32.mrb[0].mxu0
      %1667 = vdwg.mxu0
      %v1668 = vadd.f32 %v1621, %v1663
      %v1669 = vmul.f32 %v1668, %v382
      %v1670 = vtanh.pop %v1669
      %v1671 = vmul.f32 %v1670, %v382
      %v1672 = vadd.f32 %v1671, %v383
      %v1673 = vmul.f32 %v1672, %v1608
      %1675 = vrot.lane.b32.xlu0 %v1672, 64
      %v1676 = vpop.permute.xlu0 %1675
      %v1678 = vmul.f32 %v1672, %v1676
      %1680 = vrot.lane.b32.xlu0 %v1678, 32
      %v1681 = vpop.permute.xlu0 %1680
      %v1683 = vadd.f32 %v1673, %v1681
      %v1684 = vtanh.pop %v1683
      %1686 = vrot.lane.b32.xlu0 %v1684, 64
      %v1687 = vpop.permute.xlu0 %1686
      %v1689 = vmul.f32 %v1672, %v1687
      %v1690 = vpack.c.bf16 %v1689, %v1689
      %1692 = vrot.lane.b32.xlu0 %v1689, 32
      %v1693 = vpop.permute.xlu0 %1692
      %1695 = vst.msk [vmem:[#allocation3 + $0x30] sm:$0xff] %vm544, %v1693
      %v1696 = vld [vmem:[#allocation2 + $0x38] sm:$0xff]
      %1698 = vrot.lane.b32.xlu0 %v1690, 32
      %v1699 = vpop.permute.xlu0 %1698
      %v1701 = vsel %vm544, %v1699, 0
      %1703 = vmatprep.subr.bf16.mxu0 0
      %1704 = vmatpush1.bf16.msra.mxu0 %v1246
      %1705 = vmatprep.subr.bf16.mxu0 0
      %1706 = vmatpush1.bf16.msra.mxu0 %v1247
      %1707 = vmatprep.subr.bf16.mxu0 0
      %1708 = vmatpush1.bf16.msra.mxu0 0
      %1709 = vmatprep.subr.bf16.mxu0 0
      %1710 = vmatpush1.bf16.msra.mxu0 0
      %1711 = vmatprep.subr.bf16.mxu0 0
      %1712 = vmatpush1.bf16.msra.mxu0 0
      %1713 = vmatprep.subr.bf16.mxu0 0
      %1714 = vmatpush1.bf16.msra.mxu0 0
      %1715 = vmatprep.subr.bf16.mxu0 0
      %1716 = vmatpush1.bf16.msra.mxu0 0
      %1717 = vmatprep.subr.bf16.mxu0 0
      %1718 = vmatpush1.bf16.msra.mxu0 0
      %1719 = vmatprep.subr.bf16.mxu0 0
      %1720 = vmatpush1.bf16.msra.mxu0 0
      %1721 = vmatprep.subr.bf16.mxu0 0
      %1722 = vmatpush1.bf16.msra.mxu0 0
      %1723 = vmatprep.subr.bf16.mxu0 0
      %1724 = vmatpush1.bf16.msra.mxu0 0
      %1725 = vmatprep.subr.bf16.mxu0 0
      %1726 = vmatpush1.bf16.msra.mxu0 0
      %1727 = vmatprep.subr.bf16.mxu0 0
      %1728 = vmatpush1.bf16.msra.mxu0 0
      %1729 = vmatprep.subr.bf16.mxu0 0
      %1730 = vmatpush1.bf16.msra.mxu0 0
      %1731 = vmatprep.subr.bf16.mxu0 0
      %1732 = vmatpush1.bf16.msra.mxu0 0
      %1733 = vmatprep.subr.bf16.mxu0 0
      %1734 = vmatpush1.bf16.msra.mxu0 0
      %1735 = vmatprep.mubr.bf16.mxu0 0
      %1736 = vmatmul.mubr.bf16.gmra.mrb[0].mxu0 %v1701
      %v1737 = vpop.f32.mrb[0].mxu0
      %v1738 = vadd.f32 0.0, %v1737
      %v1739 = vpop.f32.mrb[0].mxu0
      %v1740 = vpop.f32.mrb[0].mxu0
      %v1741 = vpop.f32.mrb[0].mxu0
      %1742 = vdwg.mxu0
      %v1743 = vadd.f32 %v1696, %v1738
      %v1744 = vmul.f32 %v1743, %v382
      %v1745 = vtanh.pop %v1744
      %v1746 = vmul.f32 %v1745, %v382
      %v1747 = vadd.f32 %v1746, %v383
      %v1748 = vmul.f32 %v1747, %v1683
      %1750 = vrot.lane.b32.xlu0 %v1747, 64
      %v1751 = vpop.permute.xlu0 %1750
      %v1753 = vmul.f32 %v1747, %v1751
      %1755 = vrot.lane.b32.xlu0 %v1753, 32
      %v1756 = vpop.permute.xlu0 %1755
      %v1758 = vadd.f32 %v1748, %v1756
      %v1759 = vtanh.pop %v1758
      %1761 = vrot.lane.b32.xlu0 %v1759, 64
      %v1762 = vpop.permute.xlu0 %1761
      %v1764 = vmul.f32 %v1747, %v1762
      %1766 = vrot.lane.b32.xlu0 %v1764, 32
      %v1767 = vpop.permute.xlu0 %1766
      %1769 = vst.msk [vmem:[#allocation3 + $0x38] sm:$0xff] %vm544, %v1767
      %vm1770 = vcmp.eq.s32.totalorder %v376, 1
      %v1771 = vld [vmem:[#allocation3] sm:$0xff]
      %v1772 = vsel %vm1770, 1, 0
      %1773 = vset.pattern.permute.xlu0 0
      %1774 = vperm.xlu0 %1773, %v1772
      %v1775 = vpop.permute.xlu0 %1774
      %vm1776 = vcmp.eq.s32.totalorder %v1775, 1
      %v1777 = vsel %vm1776, %v1771, 0.0
      %vm1778 = vcmp.eq.s32.totalorder %v376, 2
      %v1779 = vld [vmem:[#allocation3 + $0x8] sm:$0xff]
      %v1780 = vsel %vm1778, 1, 0
      %1781 = vset.pattern.permute.xlu0 0
      %1782 = vperm.xlu0 %1781, %v1780
      %v1783 = vpop.permute.xlu0 %1782
      %vm1784 = vcmp.eq.s32.totalorder %v1783, 1
      %v1785 = vsel %vm1784, %v1779, %v1777
      %vm1786 = vcmp.eq.s32.totalorder %v376, 3
      %v1787 = vld [vmem:[#allocation3 + $0x10] sm:$0xff]
      %v1788 = vsel %vm1786, 1, 0
      %1789 = vset.pattern.permute.xlu0 0
      %1790 = vperm.xlu0 %1789, %v1788
      %v1791 = vpop.permute.xlu0 %1790
      %vm1792 = vcmp.eq.s32.totalorder %v1791, 1
      %v1793 = vsel %vm1792, %v1787, %v1785
      %vm1794 = vcmp.eq.s32.totalorder %v376, 4
      %v1795 = vld [vmem:[#allocation3 + $0x18] sm:$0xff]
      %v1796 = vsel %vm1794, 1, 0
      %1797 = vset.pattern.permute.xlu0 0
      %1798 = vperm.xlu0 %1797, %v1796
      %v1799 = vpop.permute.xlu0 %1798
      %vm1800 = vcmp.eq.s32.totalorder %v1799, 1
      %v1801 = vsel %vm1800, %v1795, %v1793
      %vm1802 = vcmp.eq.s32.totalorder %v376, 5
      %v1803 = vld [vmem:[#allocation3 + $0x20] sm:$0xff]
      %v1804 = vsel %vm1802, 1, 0
      %1805 = vset.pattern.permute.xlu0 0
      %1806 = vperm.xlu0 %1805, %v1804
      %v1807 = vpop.permute.xlu0 %1806
      %vm1808 = vcmp.eq.s32.totalorder %v1807, 1
      %v1809 = vsel %vm1808, %v1803, %v1801
      %vm1810 = vcmp.eq.s32.totalorder %v376, 6
      %v1811 = vld [vmem:[#allocation3 + $0x28] sm:$0xff]
      %v1812 = vsel %vm1810, 1, 0
      %1813 = vset.pattern.permute.xlu0 0
      %1814 = vperm.xlu0 %1813, %v1812
      %v1815 = vpop.permute.xlu0 %1814
      %vm1816 = vcmp.eq.s32.totalorder %v1815, 1
      %v1817 = vsel %vm1816, %v1811, %v1809
      %vm1818 = vcmp.eq.s32.totalorder %v376, 7
      %v1819 = vld [vmem:[#allocation3 + $0x30] sm:$0xff]
      %v1820 = vsel %vm1818, 1, 0
      %1821 = vset.pattern.permute.xlu0 0
      %1822 = vperm.xlu0 %1821, %v1820
      %v1823 = vpop.permute.xlu0 %1822
      %vm1824 = vcmp.eq.s32.totalorder %v1823, 1
      %v1825 = vsel %vm1824, %v1819, %v1817
      %vm1826 = vcmp.eq.s32.totalorder %v376, 8
      %v1827 = vld [vmem:[#allocation3 + $0x38] sm:$0xff]
      %v1828 = vsel %vm1826, 1, 0
      %1829 = vset.pattern.permute.xlu0 0
      %1830 = vperm.xlu0 %1829, %v1828
      %v1831 = vpop.permute.xlu0 %1830
      %vm1832 = vcmp.eq.s32.totalorder %v1831, 1
      %v1833 = vsel %vm1832, %v1827, %v1825
      %v1834 = vpack.c.bf16 %v1833, %v1833
      %v1835 = vld [vmem:[%s8] sm:$0xf]
      %v1836 = vld [vmem:[%s8 + $0x4] sm:$0xf]
      %v1837 = vld [vmem:[%s8 + $0x8] sm:$0xf]
      %v1838 = vld [vmem:[%s8 + $0xc] sm:$0xf]
      %v1839 = vld [vmem:[%s9] sm:$0x1]
      %v1841 = vlaneseq
      %v1842 = vshrl.u32 %v1841, 7
      %v1843 = vsub.s32 0, %v1842
      %v1844 = vrot.slane %v1839, %v1843
      %v1850 = vunpack.c.l.b16 %v1835
      %v1851 = vunpack.c.l.b16 %v1836
      %v1852 = vunpack.c.l.b16 %v1837
      %v1853 = vunpack.c.l.b16 %v1838
      %v1854 = vpack.c.b16 %v1851, %v1850
      %v1855 = vpack.c.b16 %v1853, %v1852
      %v1859 = vsel %vm544, %v1834, 0
      %1861 = vmatprep.subr.bf16.mxu0 0
      %1862 = vmatpush1.bf16.msra.mxu0 %v1854
      %1863 = vmatprep.subr.bf16.mxu0 0
      %1864 = vmatpush1.bf16.msra.mxu0 %v1855
      %1865 = vmatprep.subr.bf16.mxu0 0
      %1866 = vmatpush1.bf16.msra.mxu0 0
      %1867 = vmatprep.subr.bf16.mxu0 0
      %1868 = vmatpush1.bf16.msra.mxu0 0
      %1869 = vmatprep.subr.bf16.mxu0 0
      %1870 = vmatpush1.bf16.msra.mxu0 0
      %1871 = vmatprep.subr.bf16.mxu0 0
      %1872 = vmatpush1.bf16.msra.mxu0 0
      %1873 = vmatprep.subr.bf16.mxu0 0
      %1874 = vmatpush1.bf16.msra.mxu0 0
      %1875 = vmatprep.subr.bf16.mxu0 0
      %1876 = vmatpush1.bf16.msra.mxu0 0
      %1877 = vmatprep.subr.bf16.mxu0 0
      %1878 = vmatpush1.bf16.msra.mxu0 0
      %1879 = vmatprep.subr.bf16.mxu0 0
      %1880 = vmatpush1.bf16.msra.mxu0 0
      %1881 = vmatprep.subr.bf16.mxu0 0
      %1882 = vmatpush1.bf16.msra.mxu0 0
      %1883 = vmatprep.subr.bf16.mxu0 0
      %1884 = vmatpush1.bf16.msra.mxu0 0
      %1885 = vmatprep.subr.bf16.mxu0 0
      %1886 = vmatpush1.bf16.msra.mxu0 0
      %1887 = vmatprep.subr.bf16.mxu0 0
      %1888 = vmatpush1.bf16.msra.mxu0 0
      %1889 = vmatprep.subr.bf16.mxu0 0
      %1890 = vmatpush1.bf16.msra.mxu0 0
      %1891 = vmatprep.subr.bf16.mxu0 0
      %1892 = vmatpush1.bf16.msra.mxu0 0
      %1893 = vmatprep.mubr.bf16.mxu0 0
      %1894 = vmatmul.mubr.bf16.gmra.mrb[0].mxu0 %v1859
      %v1895 = vpop.f32.mrb[0].mxu0
      %v1896 = vadd.f32 %v1844, %v1895
      %v1897 = vpop.f32.mrb[0].mxu0
      %v1898 = vpop.f32.mrb[0].mxu0
      %v1899 = vpop.f32.mrb[0].mxu0
      %1900 = vdwg.mxu0
      %vm1901 = vcmask 64512
      %1902 = vst.msk [vmem:[%s374] sm:$0xff] %vm1901, %v1896
      %p1903 = scmp.lt.s32.totalorder %s21, 1
      %s1904 = scalar_select %p1903, %s21, 1
      %s1905 = smul.addr %s1904, 8
      %s1906 = scalar_lea.vmem %s10, %s1905
      // Predicated region
      $region61: #{basic_lstm_forward.1} parent=59 // pred_check
        %p1907 = pneg %p259
      $region62: #{basic_lstm_forward.1} parent=59 // pred_check_branch
        %1909 = sbr.rel (%p1907) target = $region64
      $region63: #{basic_lstm_forward.1} parent=59 // pred_region
        _
      $region64: #{basic_lstm_forward.1} parent=59 // pred_fallthru
        _
    $region60: #{basic_lstm_forward.1} parent=5 // pred_fallthru
      _
    %p1910 = scmp.le.s32.totalorder 2, %s16
    // Predicated region
    $region65: #{basic_lstm_forward.1} parent=5 // pred_check
      %p1911 = pneg %p1910
    $region66: #{basic_lstm_forward.1} parent=5 // pred_check_branch
      %1913 = sbr.rel (%p1911) target = $region68
    $region67: #{basic_lstm_forward.1} parent=5 // pred_region
      %s1914 = ssub.s32 %s16, 2
      // Predicated region
      $region69: #{basic_lstm_forward.1} parent=67 // pred_check
        %p1915 = pneg %p265
      $region70: #{basic_lstm_forward.1} parent=67 // pred_check_branch
        %1917 = sbr.rel (%p1915) target = $region72
      $region71: #{basic_lstm_forward.1} parent=67 // pred_region
        %p1918 = scmp.lt.s32.totalorder %s22, 1
        %s1919 = scalar_select %p1918, %s22, 1
        %s1920 = smul.addr %s1919, 8
        %s1921 = scalar_lea.vmem %s10, %s1920
      $region72: #{basic_lstm_forward.1} parent=67 // pred_fallthru
        _
    $region68: #{basic_lstm_forward.1} parent=5 // pred_fallthru
      _
  $region6: #{basic_lstm_forward.1} parent=0 // loop_footer
    %s20 = sadd.s32 1, %s16
  $region7: #{basic_lstm_forward.1} parent=0 // loop_footer_branch
    %15 = sbr.rel target = $region3
  $region8: #{basic_lstm_forward.1} parent=0 // loop_exit
    _

</llo_original>
